<compile_context>
chip_gen: v5e
topology: v5e:2x2
jax: 0.10.0
libtpu: 0.0.40
codegen_flags: <defaults>
</compile_context>

<pallas_src>
import jax
import jax.numpy as jnp
from jax.experimental import pallas as pl
from jax.experimental.pallas import tpu as pltpu


# --------------------------------------------------------------------------
# Kernel
# --------------------------------------------------------------------------
def _edge_attn_kernel(e_ref, ki_ref, kj_ref, vi_ref, vj_ref,
                      mi_ref, mj_ref, wq_ref, bq_ref, eo_ref):
    # Blocks per grid step (b, it, jt):
    #   e_ref  (1, TI, TJ, He)  edge tile (input dtype)
    #   ki_ref (1, TI, D)  K rows for the i tile (already scaled by 1/sqrt(D))
    #   kj_ref (1, TJ, D)  K rows for the j tile
    #   vi_ref (1, TI, D)  V rows for the i tile
    #   vj_ref (1, TJ, D)  V rows for the j tile
    #   mi_ref (1, TI, 1)  node mask (i side), mj_ref (1, TJ, 1) node mask (j side)
    #   wq_ref (He, D), bq_ref (1, D)
    #   eo_ref (1, TI, TJ, D)
    TI = e_ref.shape[1]
    TJ = e_ref.shape[2]
    He = e_ref.shape[3]
    D = wq_ref.shape[1]

    # Q_edge projection for this tile: MXU matmul, f32 accumulation.
    e_tile = e_ref[0]                                        # (TI, TJ, He)
    q_e = jnp.dot(e_tile.reshape(TI * TJ, He), wq_ref[...],
                  preferred_element_type=jnp.float32)        # (TI*TJ, D)
    q_e = (q_e + bq_ref[...]).reshape(TI, TJ, D)             # (TI, TJ, D) f32

    k_i = ki_ref[0]            # (TI, D)  f32 (1/sqrt(D) folded in once)
    k_j = kj_ref[0]            # (TJ, D)
    v_i = vi_ref[0]            # (TI, D)
    v_j = vj_ref[0]            # (TJ, D)
    m_i = mi_ref[0]            # (TI, 1)  {0,1}
    m_j = mj_ref[0]            # (TJ, 1)  {0,1}

    # Per-edge attention scores (scale already inside K).
    s_i = jnp.sum(q_e * k_j[None, :, :], axis=-1)            # (TI, TJ) uses K[node j]
    s_j = jnp.sum(q_e * k_i[:, None, :], axis=-1)            # (TI, TJ) uses K[node i]

    # Att_i/(Att_i+Att_j) == sigmoid(s_i - s_j); the j-ratio is its complement.
    # Exact on valid pairs, bounded & finally masked on invalid ones, matching
    # the reference masked_fill + final mask semantics.  Node-i mask is folded
    # into the ratios, node-j mask applied once on the (TI, TJ, D) result.
    r_i = m_i / (1.0 + jnp.exp(s_j - s_i))                   # (TI, TJ)
    r_j = m_i - r_i                                          # m_i * (1 - sigmoid)

    e_out = (r_i[:, :, None] * v_j[None, :, :]
             + r_j[:, :, None] * v_i[:, None, :]) * m_j[None, :, :]   # (TI, TJ, D)

    eo_ref[0] = e_out.astype(eo_ref.dtype)
    # TODO(synk): nn.Dropout(drop) is identity for drop=0.0 and is omitted.


# --------------------------------------------------------------------------
# Tiling / VMEM planning (generation-aware)
# --------------------------------------------------------------------------
def _vmem_capacity_bytes():
    """Per-core VMEM capacity; conservative fallback if the query fails."""
    try:
        cap = getattr(pltpu.get_tpu_info(), "vmem_capacity_bytes", None)
        if cap:
            return int(cap)
    except Exception:
        pass
    return 64 * 1024 * 1024   # v7x per-TC size; safe lower bound everywhere


def _tiling_plan(N, He, D, e_itemsize):
    """Pick square (TI, TJ) node tiles and a vmem limit.

    Accounts for double-buffered e / e_out blocks, the f32 intermediates
    (q_e and the output temporary, lane-padded) plus a fixed slack for the
    small K/V/mask/Wq blocks."""
    pad = lambda v: -(-v // 128) * 128
    cap = _vmem_capacity_bytes()
    vmem_limit = min((cap * 3) // 4, 100 * 1024 * 1024)   # 48 MiB on v7x, ~96 MiB on v5e/v6e
    budget = (vmem_limit * 3) // 4
    slack = 2 * 1024 * 1024

    if N < 8 or N % 8 != 0:
        return N, N, vmem_limit                           # cannot tile cleanly

    ti = tj = 8
    for t in range(8, min(N, 512) + 1, 8):
        if N % t:
            continue
        need = (2 * t * t * pad(He) * e_itemsize          # double-buffered e blocks
                + 2 * t * t * pad(D) * 4                  # double-buffered e_out blocks
                + 3 * t * t * pad(D) * 4                  # q_e + out temp + broadcast temps
                + 6 * t * pad(t) * 4                      # scores / ratios
                + slack)
        if need <= budget:
            ti = tj = t
    return ti, tj, vmem_limit


# --------------------------------------------------------------------------
# Wrapper
# --------------------------------------------------------------------------
def attention_node_to_edge_dense(x, e, node_mask, params, *, ti=None, tj=None):
    """x: (B,N,Hn), e: (B,N,N,He), node_mask: (B,N). Returns (x, e_out)."""
    B, N, Hn = x.shape
    He = e.shape[-1]
    Wq, bq = params["Wq"], params["bq"]   # weights stored (in_dim, head_dim)
    Wk, bk = params["Wk"], params["bk"]
    Wv, bv = params["Wv"], params["bv"]
    D = Wq.shape[1]

    e_itemsize = jnp.dtype(e.dtype).itemsize
    ti_auto, tj_auto, vmem_limit = _tiling_plan(N, He, D, e_itemsize)
    ti = ti_auto if ti is None else ti
    tj = tj_auto if tj is None else tj
    assert N % ti == 0 and N % tj == 0, "tiles must divide N"
    assert (ti % 8 == 0 or ti == N) and (tj % 8 == 0 or tj == N), "bad tile alignment"

    # K/V projections hoisted out of the kernel (tiny O(B*N*D) streams);
    # 1/sqrt(D) folded into K once instead of per edge.
    inv_sqrt_d = 1.0 / (float(D) ** 0.5)
    K = ((x.astype(jnp.float32) @ Wk.astype(jnp.float32)) + bk.astype(jnp.float32)) * inv_sqrt_d
    V = (x.astype(jnp.float32) @ Wv.astype(jnp.float32)) + bv.astype(jnp.float32)   # (B, N, D)

    m_col = node_mask.astype(jnp.float32).reshape(B, N, 1)

    # The dominant edge stream is read in its incoming dtype — no extra copy.
    wq_in = Wq.astype(e.dtype)
    bq_in = bq.astype(jnp.float32).reshape(1, D)

    grid_spec = pltpu.PrefetchScalarGridSpec(
        num_scalar_prefetch=0,
        grid=(B, N // ti, N // tj),
        in_specs=[
            pl.BlockSpec((1, ti, tj, He), lambda b, i, j: (b, i, j, 0)),  # e tile
            pl.BlockSpec((1, ti, D), lambda b, i, j: (b, i, 0)),          # K, i tile
            pl.BlockSpec((1, tj, D), lambda b, i, j: (b, j, 0)),          # K, j tile
            pl.BlockSpec((1, ti, D), lambda b, i, j: (b, i, 0)),          # V, i tile
            pl.BlockSpec((1, tj, D), lambda b, i, j: (b, j, 0)),          # V, j tile
            pl.BlockSpec((1, ti, 1), lambda b, i, j: (b, i, 0)),          # mask, i side
            pl.BlockSpec((1, tj, 1), lambda b, i, j: (b, j, 0)),          # mask, j side
            pl.BlockSpec((He, D), lambda b, i, j: (0, 0)),                # Wq
            pl.BlockSpec((1, D), lambda b, i, j: (0, 0)),                 # bq
        ],
        out_specs=pl.BlockSpec((1, ti, tj, D), lambda b, i, j: (b, i, j, 0)),
    )

    # Advisory cost: the kernel is HBM-bound (edge read + edge-out write dominate).
    flops = int(2 * B * N * N * He * D + 10 * B * N * N * D)
    bytes_accessed = int(B * N * N * He * e_itemsize
                         + B * N * N * D * e_itemsize
                         + 2 * B * N * D * 4 + B * N * 4)
    cost = pl.CostEstimate(flops=flops, transcendentals=int(B * N * N),
                           bytes_accessed=bytes_accessed)

    e_out = pl.pallas_call(
        _edge_attn_kernel,
        out_shape=jax.ShapeDtypeStruct((B, N, N, D), e.dtype),
        grid_spec=grid_spec,
        compiler_params=pltpu.CompilerParams(
            # No accumulator across grid steps -> all axes safely parallel
            # (lets 2-TC chips split batch, i-tiles or j-tiles even when B==1).
            dimension_semantics=("parallel", "parallel", "parallel"),
            vmem_limit_bytes=int(vmem_limit),
        ),
        cost_estimate=cost,
    )(e, K, K, V, V, m_col, m_col, wq_in, bq_in)

    # The module returns x untouched; no kernel work / HBM traffic for it.
    return x, e_out


# --------------------------------------------------------------------------
# Pure-JAX reference (transcription of the PyTorch forward) for validation
# --------------------------------------------------------------------------
def reference(x, e, node_mask, params):
    Wq, bq = params["Wq"], params["bq"]
    Wk, bk = params["Wk"], params["bk"]
    Wv, bv = params["Wv"], params["bv"]
    D = Wq.shape[1]
    sqrt_d = jnp.sqrt(jnp.float32(D))

    x_mask = node_mask[..., None]                 # (B, N, 1)
    e_mask_1 = x_mask[:, :, None, :]              # (B, N, 1, 1)
    e_mask_2 = x_mask[:, None, :, :]              # (B, 1, N, 1)

    Q_edge = (e @ Wq + bq) * e_mask_1 * e_mask_2  # (B, N, N, D)
    K_node = (x @ Wk + bk) * x_mask               # (B, N, D)
    V_node = (x @ Wv + bv) * x_mask

    K_i = K_node[:, None, :, :]                   # K at node j
    V_i = V_node[:, None, :, :]
    K_j = K_node[:, :, None, :]                   # K at node i
    V_j = V_node[:, :, None, :]

    att_mask = (node_mask[:, None, :] * node_mask[:, :, None]) > 0   # (B, N, N)

    Att_i = jnp.exp(jnp.sum(Q_edge * K_i, axis=-1) / sqrt_d)
    Att_i = jnp.where(att_mask, Att_i, 1e-9)
    Att_j = jnp.exp(jnp.sum(Q_edge * K_j, axis=-1) / sqrt_d)
    Att_j = jnp.where(att_mask, Att_j, 1e-9)
    Att_sum = jnp.where(att_mask, Att_i + Att_j, 1e-9)
    Att_i = Att_i / Att_sum
    Att_j = Att_j / Att_sum

    e_out = Att_i[..., None] * V_i + Att_j[..., None] * V_j
    e_out = e_out * e_mask_1 * e_mask_2
    return x, e_out


if __name__ == "__main__":
    B, N, H, D = 2, 32, 128, 64   # batch, nodes, hidden_dim, head_dim

    key = jax.random.PRNGKey(0)
    kx, ke, k1, k2, k3, k4, k5, k6 = jax.random.split(key, 8)
    x = jax.random.normal(kx, (B, N, H), jnp.float32)
    e = jax.random.normal(ke, (B, N, N, H), jnp.float32)
    # deterministic node mask: batch 0 keeps 23 nodes, batch 1 keeps all 32
    valid = jnp.array([23, 32])
    node_mask = (jnp.arange(N)[None, :] < valid[:, None]).astype(jnp.float32)

    # Synthetic Linear params: weights stored (in_dim, head_dim) (= W^T of torch).
    s = 0.08
    params = {
        "Wq": s * jax.random.normal(k1, (H, D), jnp.float32),
        "bq": s * jax.random.normal(k2, (1, D), jnp.float32),
        "Wk": s * jax.random.normal(k3, (H, D), jnp.float32),
        "bk": s * jax.random.normal(k4, (1, D), jnp.float32),
        "Wv": s * jax.random.normal(k5, (H, D), jnp.float32),
        "bv": s * jax.random.normal(k6, (1, D), jnp.float32),
    }

    # ti=tj=16 forces a 2x2 tile grid per batch so the streaming pipeline is
    # exercised even at this toy N (the auto-planner would pick a single tile).
    x_out, e_out = attention_node_to_edge_dense(x, e, node_mask, params, ti=16, tj=16)
    jax.block_until_ready((x_out, e_out))

    x_ref, e_ref = reference(x, e, node_mask, params)
    assert jnp.allclose(x_out, x_ref), "x passthrough mismatch"
    assert jnp.allclose(e_out, e_ref, atol=2e-2, rtol=2e-2), "e_out mismatch"

    print("KERNEL_OK")
</pallas_src>

<mosaic_0001>
module attributes {stable_mosaic.version = 11 : i64} {
  func.func @_edge_attn_kernel(%arg0: i32, %arg1: i32, %arg2: i32, %arg3: memref<1x16x16x128xf32, #tpu.memory_space<vmem>>, %arg4: memref<1x16x64xf32, #tpu.memory_space<vmem>>, %arg5: memref<1x16x64xf32, #tpu.memory_space<vmem>>, %arg6: memref<1x16x64xf32, #tpu.memory_space<vmem>>, %arg7: memref<1x16x64xf32, #tpu.memory_space<vmem>>, %arg8: memref<1x16x1xf32, #tpu.memory_space<vmem>>, %arg9: memref<1x16x1xf32, #tpu.memory_space<vmem>>, %arg10: memref<128x64xf32, #tpu.memory_space<vmem>>, %arg11: memref<1x64xf32, #tpu.memory_space<vmem>>, %arg12: memref<1x16x16x64xf32, #tpu.memory_space<vmem>>) attributes {dimension_semantics = [#tpu.dimension_semantics<parallel>, #tpu.dimension_semantics<parallel>, #tpu.dimension_semantics<parallel>], iteration_bounds = array<i64: 2, 2, 2>, scalar_prefetch = 0 : i64, scratch_operands = 0 : i64, tpu.core_type = #tpu.core_type<tc>, window_params = [{transform_indices = @transform_0, window_bounds = array<i64: 1, 16, 16, 128>}, {transform_indices = @transform_1, window_bounds = array<i64: 1, 16, 64>}, {transform_indices = @transform_2, window_bounds = array<i64: 1, 16, 64>}, {transform_indices = @transform_3, window_bounds = array<i64: 1, 16, 64>}, {transform_indices = @transform_4, window_bounds = array<i64: 1, 16, 64>}, {transform_indices = @transform_5, window_bounds = array<i64: 1, 16, 1>}, {transform_indices = @transform_6, window_bounds = array<i64: 1, 16, 1>}, {pipeline_mode = #tpu.pipeline_mode<synchronous>, transform_indices = @transform_7, window_bounds = array<i64: 128, 64>}, {pipeline_mode = #tpu.pipeline_mode<synchronous>, transform_indices = @transform_8, window_bounds = array<i64: 1, 64>}, {transform_indices = @transform_9, window_bounds = array<i64: 1, 16, 16, 64>}]} {
    %c0 = arith.constant 0 : index
    %c0_0 = arith.constant 0 : index
    %c0_1 = arith.constant 0 : index
    %c0_2 = arith.constant 0 : index
    %0 = vector.load %arg3[%c0, %c0_0, %c0_1, %c0_2] : memref<1x16x16x128xf32, #tpu.memory_space<vmem>>, vector<1x16x16x128xf32>
    %1 = vector.shape_cast %0 : vector<1x16x16x128xf32> to vector<16x16x128xf32>
    %2 = vector.shape_cast %1 : vector<16x16x128xf32> to vector<256x128xf32>
    %c0_3 = arith.constant 0 : index
    %c0_4 = arith.constant 0 : index
    %3 = vector.load %arg10[%c0_3, %c0_4] : memref<128x64xf32, #tpu.memory_space<vmem>>, vector<128x64xf32>
    %cst = arith.constant dense<0.000000e+00> : vector<256x64xf32>
    %4 = tpu.matmul %2, %3, %cst {dimension_numbers = #tpu.dot_dimension_numbers<[1], [0], [0], [1], [0, 0, 1, 1], [], []>} : vector<256x128xf32>, vector<128x64xf32>, vector<256x64xf32> -> vector<256x64xf32>
    %c0_5 = arith.constant 0 : index
    %c0_6 = arith.constant 0 : index
    %5 = vector.load %arg11[%c0_5, %c0_6] : memref<1x64xf32, #tpu.memory_space<vmem>>, vector<1x64xf32>
    %6 = vector.broadcast %5 : vector<1x64xf32> to vector<256x64xf32>
    %7 = arith.addf %4, %6 : vector<256x64xf32>
    %8 = vector.shape_cast %7 : vector<256x64xf32> to vector<16x16x64xf32>
    %c0_7 = arith.constant 0 : index
    %c0_8 = arith.constant 0 : index
    %c0_9 = arith.constant 0 : index
    %9 = vector.load %arg4[%c0_7, %c0_8, %c0_9] : memref<1x16x64xf32, #tpu.memory_space<vmem>>, vector<1x16x64xf32>
    %10 = vector.shape_cast %9 : vector<1x16x64xf32> to vector<16x64xf32>
    %c0_10 = arith.constant 0 : index
    %c0_11 = arith.constant 0 : index
    %c0_12 = arith.constant 0 : index
    %11 = vector.load %arg5[%c0_10, %c0_11, %c0_12] : memref<1x16x64xf32, #tpu.memory_space<vmem>>, vector<1x16x64xf32>
    %12 = vector.shape_cast %11 : vector<1x16x64xf32> to vector<16x64xf32>
    %c0_13 = arith.constant 0 : index
    %c0_14 = arith.constant 0 : index
    %c0_15 = arith.constant 0 : index
    %13 = vector.load %arg6[%c0_13, %c0_14, %c0_15] : memref<1x16x64xf32, #tpu.memory_space<vmem>>, vector<1x16x64xf32>
    %14 = vector.shape_cast %13 : vector<1x16x64xf32> to vector<16x64xf32>
    %c0_16 = arith.constant 0 : index
    %c0_17 = arith.constant 0 : index
    %c0_18 = arith.constant 0 : index
    %15 = vector.load %arg7[%c0_16, %c0_17, %c0_18] : memref<1x16x64xf32, #tpu.memory_space<vmem>>, vector<1x16x64xf32>
    %16 = vector.shape_cast %15 : vector<1x16x64xf32> to vector<16x64xf32>
    %c0_19 = arith.constant 0 : index
    %c0_20 = arith.constant 0 : index
    %c0_21 = arith.constant 0 : index
    %17 = vector.load %arg8[%c0_19, %c0_20, %c0_21] : memref<1x16x1xf32, #tpu.memory_space<vmem>>, vector<1x16x1xf32>
    %18 = vector.shape_cast %17 : vector<1x16x1xf32> to vector<16x1xf32>
    %c0_22 = arith.constant 0 : index
    %c0_23 = arith.constant 0 : index
    %c0_24 = arith.constant 0 : index
    %19 = vector.load %arg9[%c0_22, %c0_23, %c0_24] : memref<1x16x1xf32, #tpu.memory_space<vmem>>, vector<1x16x1xf32>
    %20 = vector.shape_cast %19 : vector<1x16x1xf32> to vector<16x1xf32>
    %21 = vector.shape_cast %12 : vector<16x64xf32> to vector<1x16x64xf32>
    %22 = vector.broadcast %21 : vector<1x16x64xf32> to vector<16x16x64xf32>
    %23 = arith.mulf %8, %22 : vector<16x16x64xf32>
    %cst_25 = arith.constant dense<0.000000e+00> : vector<16x16xf32>
    %24 = vector.multi_reduction <add>, %23, %cst_25 [2] : vector<16x16x64xf32> to vector<16x16xf32>
    %25 = vector.shape_cast %10 : vector<16x64xf32> to vector<16x1x64xf32>
    %26 = vector.broadcast %25 : vector<16x1x64xf32> to vector<16x16x64xf32>
    %27 = arith.mulf %8, %26 : vector<16x16x64xf32>
    %cst_26 = arith.constant dense<0.000000e+00> : vector<16x16xf32>
    %28 = vector.multi_reduction <add>, %27, %cst_26 [2] : vector<16x16x64xf32> to vector<16x16xf32>
    %29 = arith.subf %28, %24 : vector<16x16xf32>
    %30 = math.exp %29 : vector<16x16xf32>
    %cst_27 = arith.constant 1.000000e+00 : f32
    %31 = vector.broadcast %cst_27 : f32 to vector<16x16xf32>
    %32 = arith.addf %31, %30 : vector<16x16xf32>
    %33 = vector.broadcast %18 : vector<16x1xf32> to vector<16x16xf32>
    %34 = arith.divf %33, %32 : vector<16x16xf32>
    %35 = vector.broadcast %18 : vector<16x1xf32> to vector<16x16xf32>
    %36 = arith.subf %35, %34 : vector<16x16xf32>
    %37 = vector.shape_cast %34 : vector<16x16xf32> to vector<16x16x1xf32>
    %38 = vector.shape_cast %16 : vector<16x64xf32> to vector<1x16x64xf32>
    %39 = vector.broadcast %37 : vector<16x16x1xf32> to vector<16x16x64xf32>
    %40 = vector.broadcast %38 : vector<1x16x64xf32> to vector<16x16x64xf32>
    %41 = arith.mulf %39, %40 : vector<16x16x64xf32>
    %42 = vector.shape_cast %36 : vector<16x16xf32> to vector<16x16x1xf32>
    %43 = vector.shape_cast %14 : vector<16x64xf32> to vector<16x1x64xf32>
    %44 = vector.broadcast %42 : vector<16x16x1xf32> to vector<16x16x64xf32>
    %45 = vector.broadcast %43 : vector<16x1x64xf32> to vector<16x16x64xf32>
    %46 = arith.mulf %44, %45 : vector<16x16x64xf32>
    %47 = arith.addf %41, %46 : vector<16x16x64xf32>
    %48 = vector.shape_cast %20 : vector<16x1xf32> to vector<1x16x1xf32>
    %49 = vector.broadcast %48 : vector<1x16x1xf32> to vector<16x16x64xf32>
    %50 = arith.mulf %47, %49 : vector<16x16x64xf32>
    %c0_28 = arith.constant 0 : index
    %c0_29 = arith.constant 0 : index
    %c0_30 = arith.constant 0 : index
    %c0_31 = arith.constant 0 : index
    %51 = vector.load %arg12[%c0_28, %c0_29, %c0_30, %c0_31] : memref<1x16x16x64xf32, #tpu.memory_space<vmem>>, vector<1x16x16x64xf32>
    %52 = vector.shape_cast %51 : vector<1x16x16x64xf32> to vector<16x16x64xf32>
    %53 = vector.shape_cast %50 : vector<16x16x64xf32> to vector<1x16x16x64xf32>
    tpu.vector_store %arg12[%c0_28, %c0_29, %c0_30, %c0_31], %53 {strides = array<i32>} : memref<1x16x16x64xf32, #tpu.memory_space<vmem>>, vector<1x16x16x64xf32>,
    return
  }
  func.func @transform_0(%arg0: i32, %arg1: i32, %arg2: i32) -> (i32, i32, i32, i32) {
    %c0_i32 = arith.constant 0 : i32
    %c0_i32_0 = arith.constant 0 : i32
    return %arg0, %arg1, %arg2, %c0_i32 : i32, i32, i32, i32
  }
  func.func @transform_1(%arg0: i32, %arg1: i32, %arg2: i32) -> (i32, i32, i32) {
    %c0_i32 = arith.constant 0 : i32
    %c0_i32_0 = arith.constant 0 : i32
    return %arg0, %arg1, %c0_i32 : i32, i32, i32
  }
  func.func @transform_2(%arg0: i32, %arg1: i32, %arg2: i32) -> (i32, i32, i32) {
    %c0_i32 = arith.constant 0 : i32
    %c0_i32_0 = arith.constant 0 : i32
    return %arg0, %arg2, %c0_i32 : i32, i32, i32
  }
  func.func @transform_3(%arg0: i32, %arg1: i32, %arg2: i32) -> (i32, i32, i32) {
    %c0_i32 = arith.constant 0 : i32
    %c0_i32_0 = arith.constant 0 : i32
    return %arg0, %arg1, %c0_i32 : i32, i32, i32
  }
  func.func @transform_4(%arg0: i32, %arg1: i32, %arg2: i32) -> (i32, i32, i32) {
    %c0_i32 = arith.constant 0 : i32
    %c0_i32_0 = arith.constant 0 : i32
    return %arg0, %arg2, %c0_i32 : i32, i32, i32
  }
  func.func @transform_5(%arg0: i32, %arg1: i32, %arg2: i32) -> (i32, i32, i32) {
    %c0_i32 = arith.constant 0 : i32
    %c0_i32_0 = arith.constant 0 : i32
    return %arg0, %arg1, %c0_i32 : i32, i32, i32
  }
  func.func @transform_6(%arg0: i32, %arg1: i32, %arg2: i32) -> (i32, i32, i32) {
    %c0_i32 = arith.constant 0 : i32
    %c0_i32_0 = arith.constant 0 : i32
    return %arg0, %arg2, %c0_i32 : i32, i32, i32
  }
  func.func @transform_7(%arg0: i32, %arg1: i32, %arg2: i32) -> (i32, i32) {
    %c0_i32 = arith.constant 0 : i32
    %c0_i32_0 = arith.constant 0 : i32
    %c0_i32_1 = arith.constant 0 : i32
    return %c0_i32, %c0_i32_0 : i32, i32
  }
  func.func @transform_8(%arg0: i32, %arg1: i32, %arg2: i32) -> (i32, i32) {
    %c0_i32 = arith.constant 0 : i32
    %c0_i32_0 = arith.constant 0 : i32
    %c0_i32_1 = arith.constant 0 : i32
    return %c0_i32, %c0_i32_0 : i32, i32
  }
  func.func @transform_9(%arg0: i32, %arg1: i32, %arg2: i32) -> (i32, i32, i32, i32) {
    %c0_i32 = arith.constant 0 : i32
    %c0_i32_0 = arith.constant 0 : i32
    return %arg0, %arg1, %arg2, %c0_i32 : i32, i32, i32, i32
  }
}

</mosaic_0001>

<llo_original>
// kernel: tpu_custom_call.1
$region0: #{tpu_custom_call.1}
  #allocation0 [shape = 'u32[]', space=smem, size = 0x4, offset = 0x4, fixed_abs, tag = 'smem constant byte address 0x4 - core index']
  #allocation1 [shape = 'u32[72,128]{1,0:T(1,128)}', space=vmem, size = 0x9000, scoped, tag = 'internal scratch']
  #allocation6 [shape = 's32[]', space=sflag, size = 0x4, offset = 0, fixed_abs, tag = 'sflag constant byte address 0x0 - dummy sync flag']
  #allocation8 [shape = 's32[]', space=sflag, size = 0x4, offset = 0, fixed_abs, tag = 'sflag constant byte address 0x0 - dummy sync flag']
  %s0 = inlined_call_operand.hbm [shape: f32[2,32,32,128], index: 0, kind: input, shape index: {}]
  %s1 = inlined_call_operand.vmem [shape: f32[2,32,64], index: 1, kind: input, shape index: {}]
  %s2 = inlined_call_operand.vmem [shape: f32[2,32,64], index: 2, kind: input, shape index: {}]
  %s3 = inlined_call_operand.vmem [shape: f32[2,32,64], index: 3, kind: input, shape index: {}]
  %s4 = inlined_call_operand.vmem [shape: f32[2,32,64], index: 4, kind: input, shape index: {}]
  %s5 = inlined_call_operand.vmem [shape: f32[2,32,1], index: 5, kind: input, shape index: {}]
  %s6 = inlined_call_operand.vmem [shape: f32[2,32,1], index: 6, kind: input, shape index: {}]
  %s7 = inlined_call_operand.vmem [shape: f32[128,64], index: 7, kind: input, shape index: {}]
  %s8 = inlined_call_operand.vmem [shape: f32[1,64], index: 8, kind: input, shape index: {}]
  %s9 = inlined_call_operand.hbm [shape: f32[2,32,32,64], index: 9, kind: output, shape index: {}]
  %s10 = sld [smem:[#allocation0]]
  $region73: #{tpu_custom_call.1} parent=0
    _
  %s12 = ssub.s32 1, %s10
  %s13 = scalar_select 0, %s12, %s10
  $region1: #{tpu_custom_call.1} parent=0
    #allocation2 [shape = 'u8[262144]{0}', space=vmem, size = 0x40000, scoped, tag = 'input window, operand 0']
    #allocation3 [shape = 's32[2]{0}', space=sflag, size = 0x8, scoped, tag = 'scoped memory for tpu_custom_call.1']
    #allocation4 [shape = 's32[2]{0}', space=sflag, size = 0x8, scoped, tag = 'scoped memory for tpu_custom_call.1']
    #allocation5 [shape = 'u8[262144]{0}', space=vmem, size = 0x40000, scoped, tag = 'output window, operand 0']
    %14 = vsyncpa [#allocation3], 0
    %s15 = scalar_lea.sflag [#allocation3], 1
    %16 = vsyncpa %s15, 0
    %17 = vsyncpa [#allocation4], 0
    %s18 = scalar_lea.sflag [#allocation4], 1
    %19 = vsyncpa %s18, 0
    loop: start=0, step=1, limit=10
    $region2: #{tpu_custom_call.1} parent=1 // loop_pre_header
      _
    $region3: #{tpu_custom_call.1} parent=1 // loop_header
      %s21 = sphi 0, %s25
      %p22 = scmp.ge.s32.totalorder %s21, 10
      %s28 = sphi 0, %s47
      %s29 = sphi 0, %s43
      %s30 = sphi 0, %s39
      %s31 = sphi 0, %s28
      %s32 = sphi 0, %s29
      %s33 = sphi 0, %s30
      %s34 = sphi 0, %s31
      %s35 = sphi 0, %s32
      %s36 = sphi 0, %s33
      %s54 = sphi 0, %s56
      %s57 = sphi 0, %s54
      %s58 = sphi 0, %s57
      %s74 = sphi 0, %s58
      %s82 = sphi 0, %s84
      %s85 = sphi 0, %s82
      %s86 = sphi 0, %s85
      %s102 = sphi 0, %s86
      %s110 = sphi 0, %s112
      %s113 = sphi 0, %s110
      %s114 = sphi 0, %s113
      %s130 = sphi 0, %s114
      %s138 = sphi 0, %s140
      %s141 = sphi 0, %s138
      %s142 = sphi 0, %s141
      %s158 = sphi 0, %s142
      %s166 = sphi 0, %s168
      %s169 = sphi 0, %s166
      %s170 = sphi 0, %s169
      %s186 = sphi 0, %s170
      %s194 = sphi 0, %s196
      %s197 = sphi 0, %s194
      %s198 = sphi 0, %s197
      %s214 = sphi 0, %s198
      %s222 = sphi 0, %s224
      %s225 = sphi 0, %s222
      %s226 = sphi 0, %s225
      %s242 = sphi 0, %s226
      %s246 = sphi 0, %s246
      %s248 = sphi 0, %s246
      %s249 = sphi 0, %s248
      %s263 = sphi 0, %s249
      %s267 = sphi 0, %s267
      %s269 = sphi 0, %s267
      %s270 = sphi 0, %s269
      %s284 = sphi 0, %s270
      %s294 = sphi 0, %s296
      %s297 = sphi 0, %s294
      %s298 = sphi 0, %s297
      %s314 = sphi 0, %s298
    $region4: #{tpu_custom_call.1} parent=1 // loop_header_branch
      %24 = sbr.rel (%p22) target = $region8
    $region5: #{tpu_custom_call.1} parent=1 // loop_body
      %s26 = ssub.s32 %s21, 1
      %s27 = ssub.s32 %s21, 2
      %s37 = sadd.s32 1, %s30
      %p38 = scmp.ge.s32.totalorder %s37, 2
      %s39 = scalar_select %p38, 0, %s37
      %s40 = sadd.s32 1, %s29
      %s41 = scalar_select %p38, %s40, %s29
      %p42 = scmp.ge.s32.totalorder %s41, 2
      %s43 = scalar_select %p42, 0, %s41
      %s44 = sadd.s32 1, %s28
      %s45 = scalar_select %p42, %s44, %s28
      %p46 = scmp.ge.s32.totalorder %s45, 2
      %s47 = scalar_select %p46, 0, %s45
      %s48 = ssub.s32 %s28, %s47
      %s49 = ssub.s32 %s29, %s43
      %s50 = sor.u32 %s48, %s49
      %s51 = ssub.s32 %s30, %s39
      %s52 = sor.u32 %s50, %s51
      %p53 = scmp.eq.s32.totalorder %s52, 0
      %s55 = sadd.s32 %s54, 1
      %s56 = scalar_select %p53, %s54, %s55
      %p59 = pneg %p53
      %p60 = scmp.eq.s32.totalorder %s21, 7
      %p61 = por %p59, %p60
      %p62 = scmp.ne.s32.totalorder %s54, %s57
      %p63 = scmp.eq.s32.totalorder %s21, 0
      %p64 = por %p62, %p63
      %p65 = scmp.ne.s32.totalorder %s54, %s57
      %p66 = scmp.eq.s32.totalorder %s26, 7
      %p67 = por %p65, %p66
      %p68 = scmp.ne.s32.totalorder %s57, %s58
      %p69 = scmp.eq.s32.totalorder %s26, 0
      %p70 = por %p68, %p69
      %p71 = scmp.ne.s32.totalorder %s57, %s58
      %p72 = scmp.eq.s32.totalorder %s27, 7
      %p73 = por %p71, %p72
      %p75 = scmp.ne.s32.totalorder %s58, %s74
      %p76 = scmp.eq.s32.totalorder %s27, 0
      %p77 = por %p75, %p76
      %s78 = ssub.s32 %s28, %s47
      %s79 = ssub.s32 %s29, %s43
      %s80 = sor.u32 %s78, %s79
      %p81 = scmp.eq.s32.totalorder %s80, 0
      %s83 = sadd.s32 %s82, 1
      %s84 = scalar_select %p81, %s82, %s83
      %p87 = pneg %p81
      %p88 = scmp.eq.s32.totalorder %s21, 7
      %p89 = por %p87, %p88
      %p90 = scmp.ne.s32.totalorder %s82, %s85
      %p91 = scmp.eq.s32.totalorder %s21, 0
      %p92 = por %p90, %p91
      %p93 = scmp.ne.s32.totalorder %s82, %s85
      %p94 = scmp.eq.s32.totalorder %s26, 7
      %p95 = por %p93, %p94
      %p96 = scmp.ne.s32.totalorder %s85, %s86
      %p97 = scmp.eq.s32.totalorder %s26, 0
      %p98 = por %p96, %p97
      %p99 = scmp.ne.s32.totalorder %s85, %s86
      %p100 = scmp.eq.s32.totalorder %s27, 7
      %p101 = por %p99, %p100
      %p103 = scmp.ne.s32.totalorder %s86, %s102
      %p104 = scmp.eq.s32.totalorder %s27, 0
      %p105 = por %p103, %p104
      %s106 = ssub.s32 %s28, %s47
      %s107 = ssub.s32 %s30, %s39
      %s108 = sor.u32 %s106, %s107
      %p109 = scmp.eq.s32.totalorder %s108, 0
      %s111 = sadd.s32 %s110, 1
      %s112 = scalar_select %p109, %s110, %s111
      %p115 = pneg %p109
      %p116 = scmp.eq.s32.totalorder %s21, 7
      %p117 = por %p115, %p116
      %p118 = scmp.ne.s32.totalorder %s110, %s113
      %p119 = scmp.eq.s32.totalorder %s21, 0
      %p120 = por %p118, %p119
      %p121 = scmp.ne.s32.totalorder %s110, %s113
      %p122 = scmp.eq.s32.totalorder %s26, 7
      %p123 = por %p121, %p122
      %p124 = scmp.ne.s32.totalorder %s113, %s114
      %p125 = scmp.eq.s32.totalorder %s26, 0
      %p126 = por %p124, %p125
      %p127 = scmp.ne.s32.totalorder %s113, %s114
      %p128 = scmp.eq.s32.totalorder %s27, 7
      %p129 = por %p127, %p128
      %p131 = scmp.ne.s32.totalorder %s114, %s130
      %p132 = scmp.eq.s32.totalorder %s27, 0
      %p133 = por %p131, %p132
      %s134 = ssub.s32 %s28, %s47
      %s135 = ssub.s32 %s29, %s43
      %s136 = sor.u32 %s134, %s135
      %p137 = scmp.eq.s32.totalorder %s136, 0
      %s139 = sadd.s32 %s138, 1
      %s140 = scalar_select %p137, %s138, %s139
      %p143 = pneg %p137
      %p144 = scmp.eq.s32.totalorder %s21, 7
      %p145 = por %p143, %p144
      %p146 = scmp.ne.s32.totalorder %s138, %s141
      %p147 = scmp.eq.s32.totalorder %s21, 0
      %p148 = por %p146, %p147
      %p149 = scmp.ne.s32.totalorder %s138, %s141
      %p150 = scmp.eq.s32.totalorder %s26, 7
      %p151 = por %p149, %p150
      %p152 = scmp.ne.s32.totalorder %s141, %s142
      %p153 = scmp.eq.s32.totalorder %s26, 0
      %p154 = por %p152, %p153
      %p155 = scmp.ne.s32.totalorder %s141, %s142
      %p156 = scmp.eq.s32.totalorder %s27, 7
      %p157 = por %p155, %p156
      %p159 = scmp.ne.s32.totalorder %s142, %s158
      %p160 = scmp.eq.s32.totalorder %s27, 0
      %p161 = por %p159, %p160
      %s162 = ssub.s32 %s28, %s47
      %s163 = ssub.s32 %s30, %s39
      %s164 = sor.u32 %s162, %s163
      %p165 = scmp.eq.s32.totalorder %s164, 0
      %s167 = sadd.s32 %s166, 1
      %s168 = scalar_select %p165, %s166, %s167
      %p171 = pneg %p165
      %p172 = scmp.eq.s32.totalorder %s21, 7
      %p173 = por %p171, %p172
      %p174 = scmp.ne.s32.totalorder %s166, %s169
      %p175 = scmp.eq.s32.totalorder %s21, 0
      %p176 = por %p174, %p175
      %p177 = scmp.ne.s32.totalorder %s166, %s169
      %p178 = scmp.eq.s32.totalorder %s26, 7
      %p179 = por %p177, %p178
      %p180 = scmp.ne.s32.totalorder %s169, %s170
      %p181 = scmp.eq.s32.totalorder %s26, 0
      %p182 = por %p180, %p181
      %p183 = scmp.ne.s32.totalorder %s169, %s170
      %p184 = scmp.eq.s32.totalorder %s27, 7
      %p185 = por %p183, %p184
      %p187 = scmp.ne.s32.totalorder %s170, %s186
      %p188 = scmp.eq.s32.totalorder %s27, 0
      %p189 = por %p187, %p188
      %s190 = ssub.s32 %s28, %s47
      %s191 = ssub.s32 %s29, %s43
      %s192 = sor.u32 %s190, %s191
      %p193 = scmp.eq.s32.totalorder %s192, 0
      %s195 = sadd.s32 %s194, 1
      %s196 = scalar_select %p193, %s194, %s195
      %p199 = pneg %p193
      %p200 = scmp.eq.s32.totalorder %s21, 7
      %p201 = por %p199, %p200
      %p202 = scmp.ne.s32.totalorder %s194, %s197
      %p203 = scmp.eq.s32.totalorder %s21, 0
      %p204 = por %p202, %p203
      %p205 = scmp.ne.s32.totalorder %s194, %s197
      %p206 = scmp.eq.s32.totalorder %s26, 7
      %p207 = por %p205, %p206
      %p208 = scmp.ne.s32.totalorder %s197, %s198
      %p209 = scmp.eq.s32.totalorder %s26, 0
      %p210 = por %p208, %p209
      %p211 = scmp.ne.s32.totalorder %s197, %s198
      %p212 = scmp.eq.s32.totalorder %s27, 7
      %p213 = por %p211, %p212
      %p215 = scmp.ne.s32.totalorder %s198, %s214
      %p216 = scmp.eq.s32.totalorder %s27, 0
      %p217 = por %p215, %p216
      %s218 = ssub.s32 %s28, %s47
      %s219 = ssub.s32 %s30, %s39
      %s220 = sor.u32 %s218, %s219
      %p221 = scmp.eq.s32.totalorder %s220, 0
      %s223 = sadd.s32 %s222, 1
      %s224 = scalar_select %p221, %s222, %s223
      %p227 = pneg %p221
      %p228 = scmp.eq.s32.totalorder %s21, 7
      %p229 = por %p227, %p228
      %p230 = scmp.ne.s32.totalorder %s222, %s225
      %p231 = scmp.eq.s32.totalorder %s21, 0
      %p232 = por %p230, %p231
      %p233 = scmp.ne.s32.totalorder %s222, %s225
      %p234 = scmp.eq.s32.totalorder %s26, 7
      %p235 = por %p233, %p234
      %p236 = scmp.ne.s32.totalorder %s225, %s226
      %p237 = scmp.eq.s32.totalorder %s26, 0
      %p238 = por %p236, %p237
      %p239 = scmp.ne.s32.totalorder %s225, %s226
      %p240 = scmp.eq.s32.totalorder %s27, 7
      %p241 = por %p239, %p240
      %p243 = scmp.ne.s32.totalorder %s226, %s242
      %p244 = scmp.eq.s32.totalorder %s27, 0
      %p245 = por %p243, %p244
      %s247 = sadd.s32 %s246, 1
      %p250 = scmp.eq.s32.totalorder %s21, 7
      %p251 = scmp.ne.s32.totalorder %s246, %s248
      %p252 = scmp.eq.s32.totalorder %s21, 0
      %p253 = por %p251, %p252
      %p254 = scmp.ne.s32.totalorder %s246, %s248
      %p255 = scmp.eq.s32.totalorder %s26, 7
      %p256 = por %p254, %p255
      %p257 = scmp.ne.s32.totalorder %s248, %s249
      %p258 = scmp.eq.s32.totalorder %s26, 0
      %p259 = por %p257, %p258
      %p260 = scmp.ne.s32.totalorder %s248, %s249
      %p261 = scmp.eq.s32.totalorder %s27, 7
      %p262 = por %p260, %p261
      %p264 = scmp.ne.s32.totalorder %s249, %s263
      %p265 = scmp.eq.s32.totalorder %s27, 0
      %p266 = por %p264, %p265
      %s268 = sadd.s32 %s267, 1
      %p271 = scmp.eq.s32.totalorder %s21, 7
      %p272 = scmp.ne.s32.totalorder %s267, %s269
      %p273 = scmp.eq.s32.totalorder %s21, 0
      %p274 = por %p272, %p273
      %p275 = scmp.ne.s32.totalorder %s267, %s269
      %p276 = scmp.eq.s32.totalorder %s26, 7
      %p277 = por %p275, %p276
      %p278 = scmp.ne.s32.totalorder %s269, %s270
      %p279 = scmp.eq.s32.totalorder %s26, 0
      %p280 = por %p278, %p279
      %p281 = scmp.ne.s32.totalorder %s269, %s270
      %p282 = scmp.eq.s32.totalorder %s27, 7
      %p283 = por %p281, %p282
      %p285 = scmp.ne.s32.totalorder %s270, %s284
      %p286 = scmp.eq.s32.totalorder %s27, 0
      %p287 = por %p285, %p286
      %s288 = ssub.s32 %s28, %s47
      %s289 = ssub.s32 %s29, %s43
      %s290 = sor.u32 %s288, %s289
      %s291 = ssub.s32 %s30, %s39
      %s292 = sor.u32 %s290, %s291
      %p293 = scmp.eq.s32.totalorder %s292, 0
      %s295 = sadd.s32 %s294, 1
      %s296 = scalar_select %p293, %s294, %s295
      %p299 = pneg %p293
      %p300 = scmp.eq.s32.totalorder %s21, 7
      %p301 = por %p299, %p300
      %p302 = scmp.ne.s32.totalorder %s294, %s297
      %p303 = scmp.eq.s32.totalorder %s21, 0
      %p304 = por %p302, %p303
      %p305 = scmp.ne.s32.totalorder %s294, %s297
      %p306 = scmp.eq.s32.totalorder %s26, 7
      %p307 = por %p305, %p306
      %p308 = scmp.ne.s32.totalorder %s297, %s298
      %p309 = scmp.eq.s32.totalorder %s26, 0
      %p310 = por %p308, %p309
      %p311 = scmp.ne.s32.totalorder %s297, %s298
      %p312 = scmp.eq.s32.totalorder %s27, 7
      %p313 = por %p311, %p312
      %p315 = scmp.ne.s32.totalorder %s298, %s314
      %p316 = scmp.eq.s32.totalorder %s27, 0
      %p317 = por %p315, %p316
      %p318 = scmp.le.s32.totalorder 1, %s21
      %p319 = scmp.lt.s32.totalorder %s21, 9
      %p320 = pnand %p318, %p319
      %p321 = pneg %p320
      // Predicated region
      $region9: #{tpu_custom_call.1} parent=5 // pred_check
        _
      $region10: #{tpu_custom_call.1} parent=5 // pred_check_branch
        %323 = sbr.rel (%p320) target = $region12
      $region11: #{tpu_custom_call.1} parent=5 // pred_region
        %s324 = ssub.s32 %s21, 1
        // Predicated region
        $region13: #{tpu_custom_call.1} parent=11 // pred_check
          %p325 = pneg %p259
        $region14: #{tpu_custom_call.1} parent=11 // pred_check_branch
          %327 = sbr.rel (%p325) target = $region16
        $region15: #{tpu_custom_call.1} parent=11 // pred_region
          _
        $region16: #{tpu_custom_call.1} parent=11 // pred_fallthru
          _
        // Predicated region
        $region17: #{tpu_custom_call.1} parent=11 // pred_check
          %p328 = pneg %p280
        $region18: #{tpu_custom_call.1} parent=11 // pred_check_branch
          %330 = sbr.rel (%p328) target = $region20
        $region19: #{tpu_custom_call.1} parent=11 // pred_region
          _
        $region20: #{tpu_custom_call.1} parent=11 // pred_fallthru
          _
      $region12: #{tpu_custom_call.1} parent=5 // pred_fallthru
        _
      %p331 = scmp.lt.s32.totalorder %s21, 8
      // Predicated region
      $region21: #{tpu_custom_call.1} parent=5 // pred_check
        %p332 = pneg %p331
      $region22: #{tpu_custom_call.1} parent=5 // pred_check_branch
        %334 = sbr.rel (%p332) target = $region24
      $region23: #{tpu_custom_call.1} parent=5 // pred_region
        // Predicated region
        $region25: #{tpu_custom_call.1} parent=23 // pred_check
          %p335 = pneg %p64
        $region26: #{tpu_custom_call.1} parent=23 // pred_check_branch
          %337 = sbr.rel (%p335) target = $region28
        $region27: #{tpu_custom_call.1} parent=23 // pred_region
          #allocation7 [shape = 'u32[6]{0}', space=smem, size = 0x18, scoped, tag = 'DMA stride descriptor']
          %s338 = sand.u32 %s54, 1
          %s339 = scalar_lea.sflag [#allocation3], %s338
          %s340 = sand.u32 %s54, 1
          %s341 = smul.addr %s340, 256
          %s342 = scalar_lea.vmem [#allocation2], %s341
          %s343 = smul.u32 16, %s29
          %s344 = smul.u32 2, %s30
          %346 = vsyncadd %s339, 0
          %s347 = smul.addr %s343, 4
          %s348 = sadd.s32 %s344, %s347
          %s349 = smul.addr %s28, 128
          %s350 = sadd.s32 %s348, %s349
          %s351 = smul.addr %s350, 8
          %s352 = scalar_lea.hbm %s0, %s351
          %s354 = sshll.u32 1, 14
          %s355 = sxor.u32 4294967295, %s354
          %s357 = sld [smem:[#allocation0]]
          %s358 = sadd.s32 2, %s357
          %s360 = sshll.u32 7, 26
          %s361 = sxor.u32 4294967295, %s360
          %s362 = sand.u32 0, %s361
          %s363 = sshll.u32 %s358, 26
          %s364 = sor.u32 %s362, %s363
          %s365 = sshll.u32 %s352, 4
          %s366 = int_to_ptr.hbm [resolvable:$true] %s365
          %s367 = sshll.u32 %s342, 4
          %s368 = int_to_ptr.vmem [resolvable:$true] %s367
          %374 = sst [smem:[#allocation7]] 512
          %s375 = scalar_lea.smem [#allocation7], 1
          %376 = sst [smem:[%s375]] 256
          %s377 = scalar_lea.smem [#allocation7], 2
          %378 = sst [smem:[%s377]] 2
          %s379 = scalar_lea.smem [#allocation7], 3
          %380 = sst [smem:[%s379]] 128
          %s381 = scalar_lea.smem [#allocation7], 4
          %382 = sst [smem:[%s381]] 128
          %s383 = scalar_lea.smem [#allocation7], 5
          %384 = sst [smem:[%s383]] 8
          %386 = dma.general %s366, 4096, %s368, %s339, [#allocation6], [#allocation7], %s364, 0
        $region28: #{tpu_custom_call.1} parent=23 // pred_fallthru
          _
        // Predicated region
        $region29: #{tpu_custom_call.1} parent=23 // pred_check
          %p387 = pneg %p92
        $region30: #{tpu_custom_call.1} parent=23 // pred_check_branch
          %389 = sbr.rel (%p387) target = $region32
        $region31: #{tpu_custom_call.1} parent=23 // pred_region
          %s390 = smul.u32 2, %s29
          %p391 = scmp.lt.s32.totalorder %s28, 1
          %s392 = scalar_select %p391, %s28, 1
          %p393 = scmp.lt.s32.totalorder %s390, 3
          %s394 = scalar_select %p393, %s390, 3
          %s395 = smul.addr %s392, 4
          %s396 = sadd.s32 %s394, %s395
          %s397 = smul.addr %s396, 8
          %s398 = scalar_lea.vmem %s1, %s397
          %s399 = smul.u32 2, %s29
        $region32: #{tpu_custom_call.1} parent=23 // pred_fallthru
          _
        // Predicated region
        $region33: #{tpu_custom_call.1} parent=23 // pred_check
          %p400 = pneg %p120
        $region34: #{tpu_custom_call.1} parent=23 // pred_check_branch
          %402 = sbr.rel (%p400) target = $region36
        $region35: #{tpu_custom_call.1} parent=23 // pred_region
          %s403 = smul.u32 2, %s30
          %p404 = scmp.lt.s32.totalorder %s28, 1
          %s405 = scalar_select %p404, %s28, 1
          %p406 = scmp.lt.s32.totalorder %s403, 3
          %s407 = scalar_select %p406, %s403, 3
          %s408 = smul.addr %s405, 4
          %s409 = sadd.s32 %s407, %s408
          %s410 = smul.addr %s409, 8
          %s411 = scalar_lea.vmem %s2, %s410
          %s412 = smul.u32 2, %s30
        $region36: #{tpu_custom_call.1} parent=23 // pred_fallthru
          _
        // Predicated region
        $region37: #{tpu_custom_call.1} parent=23 // pred_check
          %p413 = pneg %p148
        $region38: #{tpu_custom_call.1} parent=23 // pred_check_branch
          %415 = sbr.rel (%p413) target = $region40
        $region39: #{tpu_custom_call.1} parent=23 // pred_region
          %s416 = smul.u32 2, %s29
          %p417 = scmp.lt.s32.totalorder %s28, 1
          %s418 = scalar_select %p417, %s28, 1
          %p419 = scmp.lt.s32.totalorder %s416, 3
          %s420 = scalar_select %p419, %s416, 3
          %s421 = smul.addr %s418, 4
          %s422 = sadd.s32 %s420, %s421
          %s423 = smul.addr %s422, 8
          %s424 = scalar_lea.vmem %s3, %s423
          %s425 = smul.u32 2, %s29
        $region40: #{tpu_custom_call.1} parent=23 // pred_fallthru
          _
        // Predicated region
        $region41: #{tpu_custom_call.1} parent=23 // pred_check
          %p426 = pneg %p176
        $region42: #{tpu_custom_call.1} parent=23 // pred_check_branch
          %428 = sbr.rel (%p426) target = $region44
        $region43: #{tpu_custom_call.1} parent=23 // pred_region
          %s429 = smul.u32 2, %s30
          %p430 = scmp.lt.s32.totalorder %s28, 1
          %s431 = scalar_select %p430, %s28, 1
          %p432 = scmp.lt.s32.totalorder %s429, 3
          %s433 = scalar_select %p432, %s429, 3
          %s434 = smul.addr %s431, 4
          %s435 = sadd.s32 %s433, %s434
          %s436 = smul.addr %s435, 8
          %s437 = scalar_lea.vmem %s4, %s436
          %s438 = smul.u32 2, %s30
        $region44: #{tpu_custom_call.1} parent=23 // pred_fallthru
          _
        // Predicated region
        $region45: #{tpu_custom_call.1} parent=23 // pred_check
          %p439 = pneg %p204
        $region46: #{tpu_custom_call.1} parent=23 // pred_check_branch
          %441 = sbr.rel (%p439) target = $region48
        $region47: #{tpu_custom_call.1} parent=23 // pred_region
          %s442 = smul.u32 2, %s29
          %p443 = scmp.lt.s32.totalorder %s28, 1
          %s444 = scalar_select %p443, %s28, 1
          %p445 = scmp.lt.s32.totalorder %s442, 3
          %s446 = scalar_select %p445, %s442, 3
          %s447 = smul.addr %s444, 4
          %s448 = sadd.s32 %s446, %s447
          %s449 = smul.addr %s448, 8
          %s450 = scalar_lea.vmem %s5, %s449
          %s451 = smul.u32 2, %s29
        $region48: #{tpu_custom_call.1} parent=23 // pred_fallthru
          _
        // Predicated region
        $region49: #{tpu_custom_call.1} parent=23 // pred_check
          %p452 = pneg %p232
        $region50: #{tpu_custom_call.1} parent=23 // pred_check_branch
          %454 = sbr.rel (%p452) target = $region52
        $region51: #{tpu_custom_call.1} parent=23 // pred_region
          %s455 = smul.u32 2, %s30
          %p456 = scmp.lt.s32.totalorder %s28, 1
          %s457 = scalar_select %p456, %s28, 1
          %p458 = scmp.lt.s32.totalorder %s455, 3
          %s459 = scalar_select %p458, %s455, 3
          %s460 = smul.addr %s457, 4
          %s461 = sadd.s32 %s459, %s460
          %s462 = smul.addr %s461, 8
          %s463 = scalar_lea.vmem %s6, %s462
          %s464 = smul.u32 2, %s30
        $region52: #{tpu_custom_call.1} parent=23 // pred_fallthru
          _
      $region24: #{tpu_custom_call.1} parent=5 // pred_fallthru
        _
      %p465 = scmp.le.s32.totalorder 1, %s21
      %p466 = scmp.lt.s32.totalorder %s21, 9
      %p467 = pnand %p465, %p466
      %p468 = pneg %p467
      // Predicated region
      $region53: #{tpu_custom_call.1} parent=5 // pred_check
        _
      $region54: #{tpu_custom_call.1} parent=5 // pred_check_branch
        %470 = sbr.rel (%p467) target = $region56
      $region55: #{tpu_custom_call.1} parent=5 // pred_region
        %s471 = ssub.s32 %s21, 1
        %s472 = sand.u32 %s57, 1
        %s473 = scalar_lea.sflag [#allocation3], %s472
        %s474 = sand.u32 %s57, 1
        %s475 = smul.addr %s474, 256
        %s476 = scalar_lea.vmem [#allocation2], %s475
        // Predicated region
        $region57: #{tpu_custom_call.1} parent=55 // pred_check
          %p477 = pneg %p70
        $region58: #{tpu_custom_call.1} parent=55 // pred_check_branch
          %479 = sbr.rel (%p477) target = $region60
        $region59: #{tpu_custom_call.1} parent=55 // pred_region
          %481 = dma.done %s473, 4096
        $region60: #{tpu_custom_call.1} parent=55 // pred_fallthru
          _
        %s482 = sand.u32 %s57, 1
        %s483 = scalar_lea.sflag [#allocation3], %s482
        %s484 = sand.u32 %s57, 1
        %s485 = smul.addr %s484, 256
        %s486 = scalar_lea.vmem [#allocation2], %s485
        %p487 = pneg %p70
        %p488 = pneg %p67
        %s489 = smul.u32 2, %s32
        %p490 = scmp.lt.s32.totalorder %s31, 1
        %s491 = scalar_select %p490, %s31, 1
        %p492 = scmp.lt.s32.totalorder %s489, 3
        %s493 = scalar_select %p492, %s489, 3
        %s494 = smul.addr %s491, 4
        %s495 = sadd.s32 %s493, %s494
        %s496 = smul.addr %s495, 8
        %s497 = scalar_lea.vmem %s1, %s496
        %p498 = pneg %p98
        %p499 = pneg %p95
        %s500 = smul.u32 2, %s33
        %p501 = scmp.lt.s32.totalorder %s31, 1
        %s502 = scalar_select %p501, %s31, 1
        %p503 = scmp.lt.s32.totalorder %s500, 3
        %s504 = scalar_select %p503, %s500, 3
        %s505 = smul.addr %s502, 4
        %s506 = sadd.s32 %s504, %s505
        %s507 = smul.addr %s506, 8
        %s508 = scalar_lea.vmem %s2, %s507
        %p509 = pneg %p126
        %p510 = pneg %p123
        %s511 = smul.u32 2, %s32
        %p512 = scmp.lt.s32.totalorder %s31, 1
        %s513 = scalar_select %p512, %s31, 1
        %p514 = scmp.lt.s32.totalorder %s511, 3
        %s515 = scalar_select %p514, %s511, 3
        %s516 = smul.addr %s513, 4
        %s517 = sadd.s32 %s515, %s516
        %s518 = smul.addr %s517, 8
        %s519 = scalar_lea.vmem %s3, %s518
        %p520 = pneg %p154
        %p521 = pneg %p151
        %s522 = smul.u32 2, %s33
        %p523 = scmp.lt.s32.totalorder %s31, 1
        %s524 = scalar_select %p523, %s31, 1
        %p525 = scmp.lt.s32.totalorder %s522, 3
        %s526 = scalar_select %p525, %s522, 3
        %s527 = smul.addr %s524, 4
        %s528 = sadd.s32 %s526, %s527
        %s529 = smul.addr %s528, 8
        %s530 = scalar_lea.vmem %s4, %s529
        %p531 = pneg %p182
        %p532 = pneg %p179
        %s533 = smul.u32 2, %s32
        %p534 = scmp.lt.s32.totalorder %s31, 1
        %s535 = scalar_select %p534, %s31, 1
        %p536 = scmp.lt.s32.totalorder %s533, 3
        %s537 = scalar_select %p536, %s533, 3
        %s538 = smul.addr %s535, 4
        %s539 = sadd.s32 %s537, %s538
        %s540 = smul.addr %s539, 8
        %s541 = scalar_lea.vmem %s5, %s540
        %p542 = pneg %p210
        %p543 = pneg %p207
        %s544 = smul.u32 2, %s33
        %p545 = scmp.lt.s32.totalorder %s31, 1
        %s546 = scalar_select %p545, %s31, 1
        %p547 = scmp.lt.s32.totalorder %s544, 3
        %s548 = scalar_select %p547, %s544, 3
        %s549 = smul.addr %s546, 4
        %s550 = sadd.s32 %s548, %s549
        %s551 = smul.addr %s550, 8
        %s552 = scalar_lea.vmem %s6, %s551
        %p553 = pneg %p238
        %p554 = pneg %p235
        %p555 = pneg %p259
        %p556 = pneg %p256
        %p557 = pneg %p280
        %p558 = pneg %p277
        %p559 = pneg %p310
        %p560 = pneg %p307
        %s561 = sand.u32 %s297, 1
        %s562 = scalar_lea.sflag [#allocation4], %s561
        %s563 = sand.u32 %s297, 1
        %s564 = smul.addr %s563, 256
        %s565 = scalar_lea.vmem [#allocation5], %s564
        %s566 = smul.u32 16, %s32
        %s567 = smul.u32 2, %s33
        %s568 = smul.u32 2, %s32
        %p569 = scmp.lt.s32.totalorder %s31, 1
        %s570 = scalar_select %p569, %s31, 1
        %p571 = scmp.lt.s32.totalorder %s568, 3
        %s572 = scalar_select %p571, %s568, 3
        %s573 = smul.addr %s570, 4
        %s574 = sadd.s32 %s572, %s573
        %s575 = smul.addr %s574, 8
        %s576 = scalar_lea.vmem %s1, %s575
        %s577 = smul.u32 2, %s32
        %s578 = smul.u32 2, %s33
        %p579 = scmp.lt.s32.totalorder %s31, 1
        %s580 = scalar_select %p579, %s31, 1
        %p581 = scmp.lt.s32.totalorder %s578, 3
        %s582 = scalar_select %p581, %s578, 3
        %s583 = smul.addr %s580, 4
        %s584 = sadd.s32 %s582, %s583
        %s585 = smul.addr %s584, 8
        %s586 = scalar_lea.vmem %s2, %s585
        %s587 = smul.u32 2, %s33
        %s588 = smul.u32 2, %s32
        %p589 = scmp.lt.s32.totalorder %s31, 1
        %s590 = scalar_select %p589, %s31, 1
        %p591 = scmp.lt.s32.totalorder %s588, 3
        %s592 = scalar_select %p591, %s588, 3
        %s593 = smul.addr %s590, 4
        %s594 = sadd.s32 %s592, %s593
        %s595 = smul.addr %s594, 8
        %s596 = scalar_lea.vmem %s3, %s595
        %s597 = smul.u32 2, %s32
        %s598 = smul.u32 2, %s33
        %p599 = scmp.lt.s32.totalorder %s31, 1
        %s600 = scalar_select %p599, %s31, 1
        %p601 = scmp.lt.s32.totalorder %s598, 3
        %s602 = scalar_select %p601, %s598, 3
        %s603 = smul.addr %s600, 4
        %s604 = sadd.s32 %s602, %s603
        %s605 = smul.addr %s604, 8
        %s606 = scalar_lea.vmem %s4, %s605
        %s607 = smul.u32 2, %s33
        %s608 = smul.u32 2, %s32
        %p609 = scmp.lt.s32.totalorder %s31, 1
        %s610 = scalar_select %p609, %s31, 1
        %p611 = scmp.lt.s32.totalorder %s608, 3
        %s612 = scalar_select %p611, %s608, 3
        %s613 = smul.addr %s610, 4
        %s614 = sadd.s32 %s612, %s613
        %s615 = smul.addr %s614, 8
        %s616 = scalar_lea.vmem %s5, %s615
        %s617 = smul.u32 2, %s32
        %s618 = smul.u32 2, %s33
        %p619 = scmp.lt.s32.totalorder %s31, 1
        %s620 = scalar_select %p619, %s31, 1
        %p621 = scmp.lt.s32.totalorder %s618, 3
        %s622 = scalar_select %p621, %s618, 3
        %s623 = smul.addr %s620, 4
        %s624 = sadd.s32 %s622, %s623
        %s625 = smul.addr %s624, 8
        %s626 = scalar_lea.vmem %s6, %s625
        %s627 = smul.u32 2, %s33
        %s628 = smul.u32 16, %s32
        %s629 = smul.u32 2, %s33
        %v630 = vld [vmem:[%s476] sm:$0xff]
        %v631 = vld [vmem:[%s476 + $0x8] sm:$0xff]
        %v632 = vld [vmem:[%s476 + $0x10] sm:$0xff]
        %v633 = vld [vmem:[%s476 + $0x18] sm:$0xff]
        %v634 = vld [vmem:[%s476 + $0x20] sm:$0xff]
        %v635 = vld [vmem:[%s476 + $0x28] sm:$0xff]
        %v636 = vld [vmem:[%s476 + $0x30] sm:$0xff]
        %v637 = vld [vmem:[%s476 + $0x38] sm:$0xff]
        %v638 = vld [vmem:[%s476 + $0x40] sm:$0xff]
        %v639 = vld [vmem:[%s476 + $0x48] sm:$0xff]
        %v640 = vld [vmem:[%s476 + $0x50] sm:$0xff]
        %v641 = vld [vmem:[%s476 + $0x58] sm:$0xff]
        %v642 = vld [vmem:[%s476 + $0x60] sm:$0xff]
        %v643 = vld [vmem:[%s476 + $0x68] sm:$0xff]
        %v644 = vld [vmem:[%s476 + $0x70] sm:$0xff]
        %v645 = vld [vmem:[%s476 + $0x78] sm:$0xff]
        %v646 = vld [vmem:[%s476 + $0x80] sm:$0xff]
        %v647 = vld [vmem:[%s476 + $0x88] sm:$0xff]
        %v648 = vld [vmem:[%s476 + $0x90] sm:$0xff]
        %v649 = vld [vmem:[%s476 + $0x98] sm:$0xff]
        %v650 = vld [vmem:[%s476 + $0xa0] sm:$0xff]
        %v651 = vld [vmem:[%s476 + $0xa8] sm:$0xff]
        %v652 = vld [vmem:[%s476 + $0xb0] sm:$0xff]
        %v653 = vld [vmem:[%s476 + $0xb8] sm:$0xff]
        %v654 = vld [vmem:[%s476 + $0xc0] sm:$0xff]
        %v655 = vld [vmem:[%s476 + $0xc8] sm:$0xff]
        %v656 = vld [vmem:[%s476 + $0xd0] sm:$0xff]
        %v657 = vld [vmem:[%s476 + $0xd8] sm:$0xff]
        %v658 = vld [vmem:[%s476 + $0xe0] sm:$0xff]
        %v659 = vld [vmem:[%s476 + $0xe8] sm:$0xff]
        %v660 = vld [vmem:[%s476 + $0xf0] sm:$0xff]
        %v661 = vld [vmem:[%s476 + $0xf8] sm:$0xff]
        %v662 = vld [vmem:[%s7] sm:$0xff]
        %v663 = vld [vmem:[%s7 + $0x8] sm:$0xff]
        %v664 = vld [vmem:[%s7 + $0x10] sm:$0xff]
        %v665 = vld [vmem:[%s7 + $0x18] sm:$0xff]
        %v666 = vld [vmem:[%s7 + $0x20] sm:$0xff]
        %v667 = vld [vmem:[%s7 + $0x28] sm:$0xff]
        %v668 = vld [vmem:[%s7 + $0x30] sm:$0xff]
        %v669 = vld [vmem:[%s7 + $0x38] sm:$0xff]
        %v670 = vld [vmem:[%s7 + $0x40] sm:$0xff]
        %v671 = vld [vmem:[%s7 + $0x48] sm:$0xff]
        %v672 = vld [vmem:[%s7 + $0x50] sm:$0xff]
        %v673 = vld [vmem:[%s7 + $0x58] sm:$0xff]
        %v674 = vld [vmem:[%s7 + $0x60] sm:$0xff]
        %v675 = vld [vmem:[%s7 + $0x68] sm:$0xff]
        %v676 = vld [vmem:[%s7 + $0x70] sm:$0xff]
        %v677 = vld [vmem:[%s7 + $0x78] sm:$0xff]
        %v678 = vld [vmem:[%s8] sm:$0x1]
        %v680 = vperm.slane %v678, 0
        %682 = vmatpush.msra.mxu0 %v677
        %683 = vmatpush.msra.mxu0 %v676
        %684 = vmatpush.msra.mxu0 %v675
        %685 = vmatpush.msra.mxu0 %v674
        %686 = vmatpush.msra.mxu0 %v673
        %687 = vmatpush.msra.mxu0 %v672
        %688 = vmatpush.msra.mxu0 %v671
        %689 = vmatpush.msra.mxu0 %v670
        %690 = vmatpush.msra.mxu0 %v669
        %691 = vmatpush.msra.mxu0 %v668
        %692 = vmatpush.msra.mxu0 %v667
        %693 = vmatpush.msra.mxu0 %v666
        %694 = vmatpush.msra.mxu0 %v665
        %695 = vmatpush.msra.mxu0 %v664
        %696 = vmatpush.msra.mxu0 %v663
        %697 = vmatpush.msra.mxu0 %v662
        %698 = vmatmul.f32.gmra.mxu0 %v630
        %v699 = vpop.f32.mrf.mxu0
        %v700 = vadd.f32 %v680, %v699
        %701 = vmatmul.f32.gmra.mxu0 %v631
        %v702 = vpop.f32.mrf.mxu0
        %v703 = vadd.f32 %v680, %v702
        %704 = vmatmul.f32.gmra.mxu0 %v632
        %v705 = vpop.f32.mrf.mxu0
        %v706 = vadd.f32 %v680, %v705
        %707 = vmatmul.f32.gmra.mxu0 %v633
        %v708 = vpop.f32.mrf.mxu0
        %v709 = vadd.f32 %v680, %v708
        %710 = vmatmul.f32.gmra.mxu0 %v634
        %v711 = vpop.f32.mrf.mxu0
        %v712 = vadd.f32 %v680, %v711
        %713 = vmatmul.f32.gmra.mxu0 %v635
        %v714 = vpop.f32.mrf.mxu0
        %v715 = vadd.f32 %v680, %v714
        %716 = vmatmul.f32.gmra.mxu0 %v636
        %v717 = vpop.f32.mrf.mxu0
        %v718 = vadd.f32 %v680, %v717
        %719 = vmatmul.f32.gmra.mxu0 %v637
        %v720 = vpop.f32.mrf.mxu0
        %v721 = vadd.f32 %v680, %v720
        %722 = vmatmul.f32.gmra.mxu0 %v638
        %v723 = vpop.f32.mrf.mxu0
        %v724 = vadd.f32 %v680, %v723
        %725 = vmatmul.f32.gmra.mxu0 %v639
        %v726 = vpop.f32.mrf.mxu0
        %v727 = vadd.f32 %v680, %v726
        %728 = vmatmul.f32.gmra.mxu0 %v640
        %v729 = vpop.f32.mrf.mxu0
        %v730 = vadd.f32 %v680, %v729
        %731 = vmatmul.f32.gmra.mxu0 %v641
        %v732 = vpop.f32.mrf.mxu0
        %v733 = vadd.f32 %v680, %v732
        %734 = vmatmul.f32.gmra.mxu0 %v642
        %v735 = vpop.f32.mrf.mxu0
        %v736 = vadd.f32 %v680, %v735
        %737 = vmatmul.f32.gmra.mxu0 %v643
        %v738 = vpop.f32.mrf.mxu0
        %v739 = vadd.f32 %v680, %v738
        %740 = vmatmul.f32.gmra.mxu0 %v644
        %v741 = vpop.f32.mrf.mxu0
        %v742 = vadd.f32 %v680, %v741
        %743 = vmatmul.f32.gmra.mxu0 %v645
        %v744 = vpop.f32.mrf.mxu0
        %v745 = vadd.f32 %v680, %v744
        %746 = vmatmul.f32.gmra.mxu0 %v646
        %v747 = vpop.f32.mrf.mxu0
        %v748 = vadd.f32 %v680, %v747
        %749 = vmatmul.f32.gmra.mxu0 %v647
        %v750 = vpop.f32.mrf.mxu0
        %v751 = vadd.f32 %v680, %v750
        %752 = vmatmul.f32.gmra.mxu0 %v648
        %v753 = vpop.f32.mrf.mxu0
        %v754 = vadd.f32 %v680, %v753
        %755 = vmatmul.f32.gmra.mxu0 %v649
        %v756 = vpop.f32.mrf.mxu0
        %v757 = vadd.f32 %v680, %v756
        %758 = vmatmul.f32.gmra.mxu0 %v650
        %v759 = vpop.f32.mrf.mxu0
        %v760 = vadd.f32 %v680, %v759
        %761 = vmatmul.f32.gmra.mxu0 %v651
        %v762 = vpop.f32.mrf.mxu0
        %v763 = vadd.f32 %v680, %v762
        %764 = vmatmul.f32.gmra.mxu0 %v652
        %v765 = vpop.f32.mrf.mxu0
        %v766 = vadd.f32 %v680, %v765
        %767 = vmatmul.f32.gmra.mxu0 %v653
        %v768 = vpop.f32.mrf.mxu0
        %v769 = vadd.f32 %v680, %v768
        %770 = vmatmul.f32.gmra.mxu0 %v654
        %v771 = vpop.f32.mrf.mxu0
        %v772 = vadd.f32 %v680, %v771
        %773 = vmatmul.f32.gmra.mxu0 %v655
        %v774 = vpop.f32.mrf.mxu0
        %v775 = vadd.f32 %v680, %v774
        %776 = vmatmul.f32.gmra.mxu0 %v656
        %v777 = vpop.f32.mrf.mxu0
        %v778 = vadd.f32 %v680, %v777
        %779 = vmatmul.f32.gmra.mxu0 %v657
        %v780 = vpop.f32.mrf.mxu0
        %v781 = vadd.f32 %v680, %v780
        %782 = vmatmul.f32.gmra.mxu0 %v658
        %v783 = vpop.f32.mrf.mxu0
        %v784 = vadd.f32 %v680, %v783
        %785 = vmatmul.f32.gmra.mxu0 %v659
        %v786 = vpop.f32.mrf.mxu0
        %v787 = vadd.f32 %v680, %v786
        %788 = vmatmul.f32.gmra.mxu0 %v660
        %v789 = vpop.f32.mrf.mxu0
        %v790 = vadd.f32 %v680, %v789
        %791 = vmatmul.f32.gmra.mxu0 %v661
        %v792 = vpop.f32.mrf.mxu0
        %v793 = vadd.f32 %v680, %v792
        %794 = vdwg.mxu0
        %v795 = vld [vmem:[%s576] sm:$0xff]
        %v796 = vld [vmem:[%s576 + $0x8] sm:$0xff]
        %v797 = vld [vmem:[%s586] sm:$0xff]
        %v798 = vld [vmem:[%s586 + $0x8] sm:$0xff]
        %v799 = vld [vmem:[%s596] sm:$0xff]
        %v800 = vld [vmem:[%s596 + $0x8] sm:$0xff]
        %v801 = vld [vmem:[%s606] sm:$0xff]
        %v802 = vld [vmem:[%s606 + $0x8] sm:$0xff]
        %v803 = vld [vmem:[%s616] sm:$0xff]
        %v804 = vld [vmem:[%s616 + $0x8] sm:$0xff]
        %v805 = vld [vmem:[%s626] sm:$0xff]
        %v806 = vld [vmem:[%s626 + $0x8] sm:$0xff]
        %v807 = vmul.f32 %v700, %v797
        %v808 = vmul.f32 %v703, %v798
        %v809 = vmul.f32 %v706, %v797
        %v810 = vmul.f32 %v709, %v798
        %v811 = vmul.f32 %v712, %v797
        %v812 = vmul.f32 %v715, %v798
        %v813 = vmul.f32 %v718, %v797
        %v814 = vmul.f32 %v721, %v798
        %v815 = vmul.f32 %v724, %v797
        %v816 = vmul.f32 %v727, %v798
        %v817 = vmul.f32 %v730, %v797
        %v818 = vmul.f32 %v733, %v798
        %v819 = vmul.f32 %v736, %v797
        %v820 = vmul.f32 %v739, %v798
        %v821 = vmul.f32 %v742, %v797
        %v822 = vmul.f32 %v745, %v798
        %v823 = vmul.f32 %v748, %v797
        %v824 = vmul.f32 %v751, %v798
        %v825 = vmul.f32 %v754, %v797
        %v826 = vmul.f32 %v757, %v798
        %v827 = vmul.f32 %v760, %v797
        %v828 = vmul.f32 %v763, %v798
        %v829 = vmul.f32 %v766, %v797
        %v830 = vmul.f32 %v769, %v798
        %v831 = vmul.f32 %v772, %v797
        %v832 = vmul.f32 %v775, %v798
        %v833 = vmul.f32 %v778, %v797
        %v834 = vmul.f32 %v781, %v798
        %v835 = vmul.f32 %v784, %v797
        %v836 = vmul.f32 %v787, %v798
        %v837 = vmul.f32 %v790, %v797
        %v838 = vmul.f32 %v793, %v798
        %vm839 = vcmask 523264
        %v840 = vsel %vm839, %v807, 0.0
        %841 = vadd.xlane.f32.xlu0 %v840
        %v842 = vpop.xlane.xlu0 %841
        %v843 = vsel %vm839, %v808, 0.0
        %844 = vadd.xlane.f32.xlu0 %v843
        %v845 = vpop.xlane.xlu0 %844
        %v846 = vsel %vm839, %v809, 0.0
        %847 = vadd.xlane.f32.xlu0 %v846
        %v848 = vpop.xlane.xlu0 %847
        %v849 = vsel %vm839, %v810, 0.0
        %850 = vadd.xlane.f32.xlu0 %v849
        %v851 = vpop.xlane.xlu0 %850
        %v852 = vsel %vm839, %v811, 0.0
        %853 = vadd.xlane.f32.xlu0 %v852
        %v854 = vpop.xlane.xlu0 %853
        %v855 = vsel %vm839, %v812, 0.0
        %856 = vadd.xlane.f32.xlu0 %v855
        %v857 = vpop.xlane.xlu0 %856
        %v858 = vsel %vm839, %v813, 0.0
        %859 = vadd.xlane.f32.xlu0 %v858
        %v860 = vpop.xlane.xlu0 %859
        %v861 = vsel %vm839, %v814, 0.0
        %862 = vadd.xlane.f32.xlu0 %v861
        %v863 = vpop.xlane.xlu0 %862
        %v864 = vsel %vm839, %v815, 0.0
        %865 = vadd.xlane.f32.xlu0 %v864
        %v866 = vpop.xlane.xlu0 %865
        %v867 = vsel %vm839, %v816, 0.0
        %868 = vadd.xlane.f32.xlu0 %v867
        %v869 = vpop.xlane.xlu0 %868
        %v870 = vsel %vm839, %v817, 0.0
        %871 = vadd.xlane.f32.xlu0 %v870
        %v872 = vpop.xlane.xlu0 %871
        %v873 = vsel %vm839, %v818, 0.0
        %874 = vadd.xlane.f32.xlu0 %v873
        %v875 = vpop.xlane.xlu0 %874
        %v876 = vsel %vm839, %v819, 0.0
        %877 = vadd.xlane.f32.xlu0 %v876
        %v878 = vpop.xlane.xlu0 %877
        %v879 = vsel %vm839, %v820, 0.0
        %880 = vadd.xlane.f32.xlu0 %v879
        %v881 = vpop.xlane.xlu0 %880
        %v882 = vsel %vm839, %v821, 0.0
        %883 = vadd.xlane.f32.xlu0 %v882
        %v884 = vpop.xlane.xlu0 %883
        %v885 = vsel %vm839, %v822, 0.0
        %886 = vadd.xlane.f32.xlu0 %v885
        %v887 = vpop.xlane.xlu0 %886
        %v888 = vsel %vm839, %v823, 0.0
        %889 = vadd.xlane.f32.xlu0 %v888
        %v890 = vpop.xlane.xlu0 %889
        %v891 = vsel %vm839, %v824, 0.0
        %892 = vadd.xlane.f32.xlu0 %v891
        %v893 = vpop.xlane.xlu0 %892
        %v894 = vsel %vm839, %v825, 0.0
        %895 = vadd.xlane.f32.xlu0 %v894
        %v896 = vpop.xlane.xlu0 %895
        %v897 = vsel %vm839, %v826, 0.0
        %898 = vadd.xlane.f32.xlu0 %v897
        %v899 = vpop.xlane.xlu0 %898
        %v900 = vsel %vm839, %v827, 0.0
        %901 = vadd.xlane.f32.xlu0 %v900
        %v902 = vpop.xlane.xlu0 %901
        %v903 = vsel %vm839, %v828, 0.0
        %904 = vadd.xlane.f32.xlu0 %v903
        %v905 = vpop.xlane.xlu0 %904
        %v906 = vsel %vm839, %v829, 0.0
        %907 = vadd.xlane.f32.xlu0 %v906
        %v908 = vpop.xlane.xlu0 %907
        %v909 = vsel %vm839, %v830, 0.0
        %910 = vadd.xlane.f32.xlu0 %v909
        %v911 = vpop.xlane.xlu0 %910
        %v912 = vsel %vm839, %v831, 0.0
        %913 = vadd.xlane.f32.xlu0 %v912
        %v914 = vpop.xlane.xlu0 %913
        %v915 = vsel %vm839, %v832, 0.0
        %916 = vadd.xlane.f32.xlu0 %v915
        %v917 = vpop.xlane.xlu0 %916
        %v918 = vsel %vm839, %v833, 0.0
        %919 = vadd.xlane.f32.xlu0 %v918
        %v920 = vpop.xlane.xlu0 %919
        %v921 = vsel %vm839, %v834, 0.0
        %922 = vadd.xlane.f32.xlu0 %v921
        %v923 = vpop.xlane.xlu0 %922
        %v924 = vsel %vm839, %v835, 0.0
        %925 = vadd.xlane.f32.xlu0 %v924
        %v926 = vpop.xlane.xlu0 %925
        %v927 = vsel %vm839, %v836, 0.0
        %928 = vadd.xlane.f32.xlu0 %v927
        %v929 = vpop.xlane.xlu0 %928
        %v930 = vsel %vm839, %v837, 0.0
        %931 = vadd.xlane.f32.xlu0 %v930
        %v932 = vpop.xlane.xlu0 %931
        %v933 = vsel %vm839, %v838, 0.0
        %934 = vadd.xlane.f32.xlu0 %v933
        %v935 = vpop.xlane.xlu0 %934
        %v938 = vrot.slane %v795, 1
        %v939 = vrot.slane %v795, 2
        %v940 = vrot.slane %v795, 3
        %v941 = vrot.slane %v795, 4
        %v942 = vrot.slane %v795, 5
        %v943 = vrot.slane %v795, 6
        %v944 = vrot.slane %v795, 7
        %v945 = vrot.slane %v796, 1
        %v946 = vrot.slane %v796, 2
        %v947 = vrot.slane %v796, 3
        %v948 = vrot.slane %v796, 4
        %v949 = vrot.slane %v796, 5
        %v950 = vrot.slane %v796, 6
        %v951 = vrot.slane %v796, 7
        %v952 = vperm.slane %v795, 0
        %v953 = vperm.slane %v938, 0
        %v954 = vperm.slane %v939, 0
        %v955 = vperm.slane %v940, 0
        %v956 = vperm.slane %v941, 0
        %v957 = vperm.slane %v942, 0
        %v958 = vperm.slane %v943, 0
        %v959 = vperm.slane %v944, 0
        %v960 = vperm.slane %v796, 0
        %v961 = vperm.slane %v945, 0
        %v962 = vperm.slane %v946, 0
        %v963 = vperm.slane %v947, 0
        %v964 = vperm.slane %v948, 0
        %v965 = vperm.slane %v949, 0
        %v966 = vperm.slane %v950, 0
        %v967 = vperm.slane %v951, 0
        %v984 = vmul.f32 %v700, %v952
        %v985 = vmul.f32 %v703, %v952
        %v986 = vmul.f32 %v706, %v953
        %v987 = vmul.f32 %v709, %v953
        %v988 = vmul.f32 %v712, %v954
        %v989 = vmul.f32 %v715, %v954
        %v990 = vmul.f32 %v718, %v955
        %v991 = vmul.f32 %v721, %v955
        %v992 = vmul.f32 %v724, %v956
        %v993 = vmul.f32 %v727, %v956
        %v994 = vmul.f32 %v730, %v957
        %v995 = vmul.f32 %v733, %v957
        %v996 = vmul.f32 %v736, %v958
        %v997 = vmul.f32 %v739, %v958
        %v998 = vmul.f32 %v742, %v959
        %v999 = vmul.f32 %v745, %v959
        %v1000 = vmul.f32 %v748, %v960
        %v1001 = vmul.f32 %v751, %v960
        %v1002 = vmul.f32 %v754, %v961
        %v1003 = vmul.f32 %v757, %v961
        %v1004 = vmul.f32 %v760, %v962
        %v1005 = vmul.f32 %v763, %v962
        %v1006 = vmul.f32 %v766, %v963
        %v1007 = vmul.f32 %v769, %v963
        %v1008 = vmul.f32 %v772, %v964
        %v1009 = vmul.f32 %v775, %v964
        %v1010 = vmul.f32 %v778, %v965
        %v1011 = vmul.f32 %v781, %v965
        %v1012 = vmul.f32 %v784, %v966
        %v1013 = vmul.f32 %v787, %v966
        %v1014 = vmul.f32 %v790, %v967
        %v1015 = vmul.f32 %v793, %v967
        %v1016 = vsel %vm839, %v984, 0.0
        %1017 = vadd.xlane.f32.xlu0 %v1016
        %v1018 = vpop.xlane.xlu0 %1017
        %v1019 = vsel %vm839, %v985, 0.0
        %1020 = vadd.xlane.f32.xlu0 %v1019
        %v1021 = vpop.xlane.xlu0 %1020
        %v1022 = vsel %vm839, %v986, 0.0
        %1023 = vadd.xlane.f32.xlu0 %v1022
        %v1024 = vpop.xlane.xlu0 %1023
        %v1025 = vsel %vm839, %v987, 0.0
        %1026 = vadd.xlane.f32.xlu0 %v1025
        %v1027 = vpop.xlane.xlu0 %1026
        %v1028 = vsel %vm839, %v988, 0.0
        %1029 = vadd.xlane.f32.xlu0 %v1028
        %v1030 = vpop.xlane.xlu0 %1029
        %v1031 = vsel %vm839, %v989, 0.0
        %1032 = vadd.xlane.f32.xlu0 %v1031
        %v1033 = vpop.xlane.xlu0 %1032
        %v1034 = vsel %vm839, %v990, 0.0
        %1035 = vadd.xlane.f32.xlu0 %v1034
        %v1036 = vpop.xlane.xlu0 %1035
        %v1037 = vsel %vm839, %v991, 0.0
        %1038 = vadd.xlane.f32.xlu0 %v1037
        %v1039 = vpop.xlane.xlu0 %1038
        %v1040 = vsel %vm839, %v992, 0.0
        %1041 = vadd.xlane.f32.xlu0 %v1040
        %v1042 = vpop.xlane.xlu0 %1041
        %v1043 = vsel %vm839, %v993, 0.0
        %1044 = vadd.xlane.f32.xlu0 %v1043
        %v1045 = vpop.xlane.xlu0 %1044
        %v1046 = vsel %vm839, %v994, 0.0
        %1047 = vadd.xlane.f32.xlu0 %v1046
        %v1048 = vpop.xlane.xlu0 %1047
        %v1049 = vsel %vm839, %v995, 0.0
        %1050 = vadd.xlane.f32.xlu0 %v1049
        %v1051 = vpop.xlane.xlu0 %1050
        %v1052 = vsel %vm839, %v996, 0.0
        %1053 = vadd.xlane.f32.xlu0 %v1052
        %v1054 = vpop.xlane.xlu0 %1053
        %v1055 = vsel %vm839, %v997, 0.0
        %1056 = vadd.xlane.f32.xlu0 %v1055
        %v1057 = vpop.xlane.xlu0 %1056
        %v1058 = vsel %vm839, %v998, 0.0
        %1059 = vadd.xlane.f32.xlu0 %v1058
        %v1060 = vpop.xlane.xlu0 %1059
        %v1061 = vsel %vm839, %v999, 0.0
        %1062 = vadd.xlane.f32.xlu0 %v1061
        %v1063 = vpop.xlane.xlu0 %1062
        %v1064 = vsel %vm839, %v1000, 0.0
        %1065 = vadd.xlane.f32.xlu0 %v1064
        %v1066 = vpop.xlane.xlu0 %1065
        %v1067 = vsel %vm839, %v1001, 0.0
        %1068 = vadd.xlane.f32.xlu0 %v1067
        %v1069 = vpop.xlane.xlu0 %1068
        %v1070 = vsel %vm839, %v1002, 0.0
        %1071 = vadd.xlane.f32.xlu0 %v1070
        %v1072 = vpop.xlane.xlu0 %1071
        %v1073 = vsel %vm839, %v1003, 0.0
        %1074 = vadd.xlane.f32.xlu0 %v1073
        %v1075 = vpop.xlane.xlu0 %1074
        %v1076 = vsel %vm839, %v1004, 0.0
        %1077 = vadd.xlane.f32.xlu0 %v1076
        %v1078 = vpop.xlane.xlu0 %1077
        %v1079 = vsel %vm839, %v1005, 0.0
        %1080 = vadd.xlane.f32.xlu0 %v1079
        %v1081 = vpop.xlane.xlu0 %1080
        %v1082 = vsel %vm839, %v1006, 0.0
        %1083 = vadd.xlane.f32.xlu0 %v1082
        %v1084 = vpop.xlane.xlu0 %1083
        %v1085 = vsel %vm839, %v1007, 0.0
        %1086 = vadd.xlane.f32.xlu0 %v1085
        %v1087 = vpop.xlane.xlu0 %1086
        %v1088 = vsel %vm839, %v1008, 0.0
        %1089 = vadd.xlane.f32.xlu0 %v1088
        %v1090 = vpop.xlane.xlu0 %1089
        %v1091 = vsel %vm839, %v1009, 0.0
        %1092 = vadd.xlane.f32.xlu0 %v1091
        %v1093 = vpop.xlane.xlu0 %1092
        %v1094 = vsel %vm839, %v1010, 0.0
        %1095 = vadd.xlane.f32.xlu0 %v1094
        %v1096 = vpop.xlane.xlu0 %1095
        %v1097 = vsel %vm839, %v1011, 0.0
        %1098 = vadd.xlane.f32.xlu0 %v1097
        %v1099 = vpop.xlane.xlu0 %1098
        %v1100 = vsel %vm839, %v1012, 0.0
        %1101 = vadd.xlane.f32.xlu0 %v1100
        %v1102 = vpop.xlane.xlu0 %1101
        %v1103 = vsel %vm839, %v1013, 0.0
        %1104 = vadd.xlane.f32.xlu0 %v1103
        %v1105 = vpop.xlane.xlu0 %1104
        %v1106 = vsel %vm839, %v1014, 0.0
        %1107 = vadd.xlane.f32.xlu0 %v1106
        %v1108 = vpop.xlane.xlu0 %1107
        %v1109 = vsel %vm839, %v1015, 0.0
        %1110 = vadd.xlane.f32.xlu0 %v1109
        %v1111 = vpop.xlane.xlu0 %1110
        %v1112 = vsub.f32 %v1018, %v842
        %v1113 = vsub.f32 %v1021, %v845
        %v1114 = vsub.f32 %v1024, %v848
        %v1115 = vsub.f32 %v1027, %v851
        %v1116 = vsub.f32 %v1030, %v854
        %v1117 = vsub.f32 %v1033, %v857
        %v1118 = vsub.f32 %v1036, %v860
        %v1119 = vsub.f32 %v1039, %v863
        %v1120 = vsub.f32 %v1042, %v866
        %v1121 = vsub.f32 %v1045, %v869
        %v1122 = vsub.f32 %v1048, %v872
        %v1123 = vsub.f32 %v1051, %v875
        %v1124 = vsub.f32 %v1054, %v878
        %v1125 = vsub.f32 %v1057, %v881
        %v1126 = vsub.f32 %v1060, %v884
        %v1127 = vsub.f32 %v1063, %v887
        %v1128 = vsub.f32 %v1066, %v890
        %v1129 = vsub.f32 %v1069, %v893
        %v1130 = vsub.f32 %v1072, %v896
        %v1131 = vsub.f32 %v1075, %v899
        %v1132 = vsub.f32 %v1078, %v902
        %v1133 = vsub.f32 %v1081, %v905
        %v1134 = vsub.f32 %v1084, %v908
        %v1135 = vsub.f32 %v1087, %v911
        %v1136 = vsub.f32 %v1090, %v914
        %v1137 = vsub.f32 %v1093, %v917
        %v1138 = vsub.f32 %v1096, %v920
        %v1139 = vsub.f32 %v1099, %v923
        %v1140 = vsub.f32 %v1102, %v926
        %v1141 = vsub.f32 %v1105, %v929
        %v1142 = vsub.f32 %v1108, %v932
        %v1143 = vsub.f32 %v1111, %v935
        %v1144 = vmul.f32 %v1112, 1.442695
        %v1145 = vpow.pop %v1144
        %v1146 = vmul.f32 %v1113, 1.442695
        %v1147 = vpow.pop %v1146
        %v1148 = vmul.f32 %v1114, 1.442695
        %v1149 = vpow.pop %v1148
        %v1150 = vmul.f32 %v1115, 1.442695
        %v1151 = vpow.pop %v1150
        %v1152 = vmul.f32 %v1116, 1.442695
        %v1153 = vpow.pop %v1152
        %v1154 = vmul.f32 %v1117, 1.442695
        %v1155 = vpow.pop %v1154
        %v1156 = vmul.f32 %v1118, 1.442695
        %v1157 = vpow.pop %v1156
        %v1158 = vmul.f32 %v1119, 1.442695
        %v1159 = vpow.pop %v1158
        %v1160 = vmul.f32 %v1120, 1.442695
        %v1161 = vpow.pop %v1160
        %v1162 = vmul.f32 %v1121, 1.442695
        %v1163 = vpow.pop %v1162
        %v1164 = vmul.f32 %v1122, 1.442695
        %v1165 = vpow.pop %v1164
        %v1166 = vmul.f32 %v1123, 1.442695
        %v1167 = vpow.pop %v1166
        %v1168 = vmul.f32 %v1124, 1.442695
        %v1169 = vpow.pop %v1168
        %v1170 = vmul.f32 %v1125, 1.442695
        %v1171 = vpow.pop %v1170
        %v1172 = vmul.f32 %v1126, 1.442695
        %v1173 = vpow.pop %v1172
        %v1174 = vmul.f32 %v1127, 1.442695
        %v1175 = vpow.pop %v1174
        %v1176 = vmul.f32 %v1128, 1.442695
        %v1177 = vpow.pop %v1176
        %v1178 = vmul.f32 %v1129, 1.442695
        %v1179 = vpow.pop %v1178
        %v1180 = vmul.f32 %v1130, 1.442695
        %v1181 = vpow.pop %v1180
        %v1182 = vmul.f32 %v1131, 1.442695
        %v1183 = vpow.pop %v1182
        %v1184 = vmul.f32 %v1132, 1.442695
        %v1185 = vpow.pop %v1184
        %v1186 = vmul.f32 %v1133, 1.442695
        %v1187 = vpow.pop %v1186
        %v1188 = vmul.f32 %v1134, 1.442695
        %v1189 = vpow.pop %v1188
        %v1190 = vmul.f32 %v1135, 1.442695
        %v1191 = vpow.pop %v1190
        %v1192 = vmul.f32 %v1136, 1.442695
        %v1193 = vpow.pop %v1192
        %v1194 = vmul.f32 %v1137, 1.442695
        %v1195 = vpow.pop %v1194
        %v1196 = vmul.f32 %v1138, 1.442695
        %v1197 = vpow.pop %v1196
        %v1198 = vmul.f32 %v1139, 1.442695
        %v1199 = vpow.pop %v1198
        %v1200 = vmul.f32 %v1140, 1.442695
        %v1201 = vpow.pop %v1200
        %v1202 = vmul.f32 %v1141, 1.442695
        %v1203 = vpow.pop %v1202
        %v1204 = vmul.f32 %v1142, 1.442695
        %v1205 = vpow.pop %v1204
        %v1206 = vmul.f32 %v1143, 1.442695
        %v1207 = vpow.pop %v1206
        %v1208 = vadd.f32 %v1145, 1.0
        %v1209 = vadd.f32 %v1147, 1.0
        %v1210 = vadd.f32 %v1149, 1.0
        %v1211 = vadd.f32 %v1151, 1.0
        %v1212 = vadd.f32 %v1153, 1.0
        %v1213 = vadd.f32 %v1155, 1.0
        %v1214 = vadd.f32 %v1157, 1.0
        %v1215 = vadd.f32 %v1159, 1.0
        %v1216 = vadd.f32 %v1161, 1.0
        %v1217 = vadd.f32 %v1163, 1.0
        %v1218 = vadd.f32 %v1165, 1.0
        %v1219 = vadd.f32 %v1167, 1.0
        %v1220 = vadd.f32 %v1169, 1.0
        %v1221 = vadd.f32 %v1171, 1.0
        %v1222 = vadd.f32 %v1173, 1.0
        %v1223 = vadd.f32 %v1175, 1.0
        %v1224 = vadd.f32 %v1177, 1.0
        %v1225 = vadd.f32 %v1179, 1.0
        %v1226 = vadd.f32 %v1181, 1.0
        %v1227 = vadd.f32 %v1183, 1.0
        %v1228 = vadd.f32 %v1185, 1.0
        %v1229 = vadd.f32 %v1187, 1.0
        %v1230 = vadd.f32 %v1189, 1.0
        %v1231 = vadd.f32 %v1191, 1.0
        %v1232 = vadd.f32 %v1193, 1.0
        %v1233 = vadd.f32 %v1195, 1.0
        %v1234 = vadd.f32 %v1197, 1.0
        %v1235 = vadd.f32 %v1199, 1.0
        %v1236 = vadd.f32 %v1201, 1.0
        %v1237 = vadd.f32 %v1203, 1.0
        %v1238 = vadd.f32 %v1205, 1.0
        %v1239 = vadd.f32 %v1207, 1.0
        %1241 = vset.pattern.permute.xlu0 0
        %1242 = vperm.xlu0 %1241, %v803
        %v1243 = vpop.permute.xlu0 %1242
        %1246 = vset.pattern.permute.xlu0 0
        %1247 = vperm.xlu0 %1246, %v804
        %v1248 = vpop.permute.xlu0 %1247
        %v1282 = vlaneseq
        %v1283 = vand.u32 %v1282, 127
        %v1284 = vperm.slane %v1208, %v1283
        %v1285 = vadd.s32 %v1283, 4294967288
        %v1286 = vperm.slane %v1209, %v1285
        %vm1287 = vcmask 130112
        %v1288 = vsel %vm1287, %v1286, %v1284
        %v1289 = vperm.slane %v1210, %v1283
        %v1290 = vperm.slane %v1211, %v1285
        %v1291 = vsel %vm1287, %v1290, %v1289
        %v1292 = vperm.slane %v1212, %v1283
        %v1293 = vperm.slane %v1213, %v1285
        %v1294 = vsel %vm1287, %v1293, %v1292
        %v1295 = vperm.slane %v1214, %v1283
        %v1296 = vperm.slane %v1215, %v1285
        %v1297 = vsel %vm1287, %v1296, %v1295
        %v1298 = vperm.slane %v1216, %v1283
        %v1299 = vperm.slane %v1217, %v1285
        %v1300 = vsel %vm1287, %v1299, %v1298
        %v1301 = vperm.slane %v1218, %v1283
        %v1302 = vperm.slane %v1219, %v1285
        %v1303 = vsel %vm1287, %v1302, %v1301
        %v1304 = vperm.slane %v1220, %v1283
        %v1305 = vperm.slane %v1221, %v1285
        %v1306 = vsel %vm1287, %v1305, %v1304
        %v1307 = vperm.slane %v1222, %v1283
        %v1308 = vperm.slane %v1223, %v1285
        %v1309 = vsel %vm1287, %v1308, %v1307
        %v1310 = vperm.slane %v1224, %v1283
        %v1311 = vperm.slane %v1225, %v1285
        %v1312 = vsel %vm1287, %v1311, %v1310
        %v1313 = vperm.slane %v1226, %v1283
        %v1314 = vperm.slane %v1227, %v1285
        %v1315 = vsel %vm1287, %v1314, %v1313
        %v1316 = vperm.slane %v1228, %v1283
        %v1317 = vperm.slane %v1229, %v1285
        %v1318 = vsel %vm1287, %v1317, %v1316
        %v1319 = vperm.slane %v1230, %v1283
        %v1320 = vperm.slane %v1231, %v1285
        %v1321 = vsel %vm1287, %v1320, %v1319
        %v1322 = vperm.slane %v1232, %v1283
        %v1323 = vperm.slane %v1233, %v1285
        %v1324 = vsel %vm1287, %v1323, %v1322
        %v1325 = vperm.slane %v1234, %v1283
        %v1326 = vperm.slane %v1235, %v1285
        %v1327 = vsel %vm1287, %v1326, %v1325
        %v1328 = vperm.slane %v1236, %v1283
        %v1329 = vperm.slane %v1237, %v1285
        %v1330 = vsel %vm1287, %v1329, %v1328
        %v1331 = vperm.slane %v1238, %v1283
        %v1332 = vperm.slane %v1239, %v1285
        %v1333 = vsel %vm1287, %v1332, %v1331
        %vm1334 = vcmask 1041409
        %v1335 = vsel %vm1334, %v1291, %v1288
        %vm1336 = vcmask 1042434
        %v1337 = vsel %vm1336, %v1294, %v1335
        %vm1338 = vcmask 1043459
        %v1339 = vsel %vm1338, %v1297, %v1337
        %vm1340 = vcmask 1044484
        %v1341 = vsel %vm1340, %v1300, %v1339
        %vm1342 = vcmask 1045509
        %v1343 = vsel %vm1342, %v1303, %v1341
        %vm1344 = vcmask 1046534
        %v1345 = vsel %vm1344, %v1306, %v1343
        %vm1346 = vcmask 1047559
        %v1347 = vsel %vm1346, %v1309, %v1345
        %v1348 = vsel %vm1334, %v1315, %v1312
        %v1349 = vsel %vm1336, %v1318, %v1348
        %v1350 = vsel %vm1338, %v1321, %v1349
        %v1351 = vsel %vm1340, %v1324, %v1350
        %v1352 = vsel %vm1342, %v1327, %v1351
        %v1353 = vsel %vm1344, %v1330, %v1352
        %v1354 = vsel %vm1346, %v1333, %v1353
        %v1357 = vrcp.pop %v1347
        %v1358 = vmul.f32 %v1347, %v1357
        %v1359 = vsub.f32 1.0, %v1358
        %v1360 = vmul.f32 %v1357, %v1359
        %v1361 = vadd.f32 %v1357, %v1360
        %vm1362 = vweird.f32 %v1347
        %vm1363 = vweird.f32 %v1357
        %vm1364 = vmor %vm1362, %vm1363
        %v1365 = vsel %vm1364, %v1357, %v1361
        %v1366 = vand.u32 2147483647, %v1347
        %vm1367 = vcmp.eq.f32.partialorder %v1366, 8.507059e+37
        %v1368 = vand.u32 %v1347, 2147483648
        %v1369 = vor.u32 1.1754944e-38, %v1368
        %v1370 = vsel %vm1367, %v1369, %v1365
        %v1371 = vmul.f32 %v1243, %v1370
        %v1372 = vrcp.pop %v1354
        %v1373 = vmul.f32 %v1354, %v1372
        %v1374 = vsub.f32 1.0, %v1373
        %v1375 = vmul.f32 %v1372, %v1374
        %v1376 = vadd.f32 %v1372, %v1375
        %vm1377 = vweird.f32 %v1354
        %vm1378 = vweird.f32 %v1372
        %vm1379 = vmor %vm1377, %vm1378
        %v1380 = vsel %vm1379, %v1372, %v1376
        %v1381 = vand.u32 2147483647, %v1354
        %vm1382 = vcmp.eq.f32.partialorder %v1381, 8.507059e+37
        %v1383 = vand.u32 %v1354, 2147483648
        %v1384 = vor.u32 1.1754944e-38, %v1383
        %v1385 = vsel %vm1382, %v1384, %v1380
        %v1386 = vmul.f32 %v1248, %v1385
        %v1387 = vsub.f32 %v1243, %v1371
        %v1388 = vsub.f32 %v1248, %v1386
        %v1389 = vperm.slane %v1371, 0
        %v1390 = vlaneseq
        %v1391 = vshrl.u32 %v1390, 7
        %1393 = vset.pattern.permute.xlu0 %v1391
        %1394 = vperm.xlu0 %1393, %v1389
        %v1395 = vpop.permute.xlu0 %1394
        %v1396 = vlaneseq
        %v1397 = vshrl.u32 %v1396, 7
        %v1398 = vadd.s32 %v1397, 8
        %1399 = vset.pattern.permute.xlu0 %v1398
        %1400 = vperm.xlu0 %1399, %v1389
        %v1401 = vpop.permute.xlu0 %1400
        %v1402 = vperm.slane %v1371, 1
        %v1403 = vlaneseq
        %v1404 = vshrl.u32 %v1403, 7
        %1406 = vset.pattern.permute.xlu0 %v1404
        %1407 = vperm.xlu0 %1406, %v1402
        %v1408 = vpop.permute.xlu0 %1407
        %v1409 = vlaneseq
        %v1410 = vshrl.u32 %v1409, 7
        %v1411 = vadd.s32 %v1410, 8
        %1412 = vset.pattern.permute.xlu0 %v1411
        %1413 = vperm.xlu0 %1412, %v1402
        %v1414 = vpop.permute.xlu0 %1413
        %v1415 = vperm.slane %v1371, 2
        %v1416 = vlaneseq
        %v1417 = vshrl.u32 %v1416, 7
        %1419 = vset.pattern.permute.xlu0 %v1417
        %1420 = vperm.xlu0 %1419, %v1415
        %v1421 = vpop.permute.xlu0 %1420
        %v1422 = vlaneseq
        %v1423 = vshrl.u32 %v1422, 7
        %v1424 = vadd.s32 %v1423, 8
        %1425 = vset.pattern.permute.xlu0 %v1424
        %1426 = vperm.xlu0 %1425, %v1415
        %v1427 = vpop.permute.xlu0 %1426
        %v1428 = vperm.slane %v1371, 3
        %v1429 = vlaneseq
        %v1430 = vshrl.u32 %v1429, 7
        %1432 = vset.pattern.permute.xlu0 %v1430
        %1433 = vperm.xlu0 %1432, %v1428
        %v1434 = vpop.permute.xlu0 %1433
        %v1435 = vlaneseq
        %v1436 = vshrl.u32 %v1435, 7
        %v1437 = vadd.s32 %v1436, 8
        %1438 = vset.pattern.permute.xlu0 %v1437
        %1439 = vperm.xlu0 %1438, %v1428
        %v1440 = vpop.permute.xlu0 %1439
        %v1441 = vperm.slane %v1371, 4
        %v1442 = vlaneseq
        %v1443 = vshrl.u32 %v1442, 7
        %1445 = vset.pattern.permute.xlu0 %v1443
        %1446 = vperm.xlu0 %1445, %v1441
        %v1447 = vpop.permute.xlu0 %1446
        %v1448 = vlaneseq
        %v1449 = vshrl.u32 %v1448, 7
        %v1450 = vadd.s32 %v1449, 8
        %1451 = vset.pattern.permute.xlu0 %v1450
        %1452 = vperm.xlu0 %1451, %v1441
        %v1453 = vpop.permute.xlu0 %1452
        %v1454 = vperm.slane %v1371, 5
        %v1455 = vlaneseq
        %v1456 = vshrl.u32 %v1455, 7
        %1458 = vset.pattern.permute.xlu0 %v1456
        %1459 = vperm.xlu0 %1458, %v1454
        %v1460 = vpop.permute.xlu0 %1459
        %v1461 = vlaneseq
        %v1462 = vshrl.u32 %v1461, 7
        %v1463 = vadd.s32 %v1462, 8
        %1464 = vset.pattern.permute.xlu0 %v1463
        %1465 = vperm.xlu0 %1464, %v1454
        %v1466 = vpop.permute.xlu0 %1465
        %v1467 = vperm.slane %v1371, 6
        %v1468 = vlaneseq
        %v1469 = vshrl.u32 %v1468, 7
        %1471 = vset.pattern.permute.xlu0 %v1469
        %1472 = vperm.xlu0 %1471, %v1467
        %v1473 = vpop.permute.xlu0 %1472
        %v1474 = vlaneseq
        %v1475 = vshrl.u32 %v1474, 7
        %v1476 = vadd.s32 %v1475, 8
        %1477 = vset.pattern.permute.xlu0 %v1476
        %1478 = vperm.xlu0 %1477, %v1467
        %v1479 = vpop.permute.xlu0 %1478
        %v1480 = vperm.slane %v1371, 7
        %v1481 = vlaneseq
        %v1482 = vshrl.u32 %v1481, 7
        %1484 = vset.pattern.permute.xlu0 %v1482
        %1485 = vperm.xlu0 %1484, %v1480
        %v1486 = vpop.permute.xlu0 %1485
        %v1487 = vlaneseq
        %v1488 = vshrl.u32 %v1487, 7
        %v1489 = vadd.s32 %v1488, 8
        %1490 = vset.pattern.permute.xlu0 %v1489
        %1491 = vperm.xlu0 %1490, %v1480
        %v1492 = vpop.permute.xlu0 %1491
        %v1493 = vperm.slane %v1386, 0
        %v1494 = vlaneseq
        %v1495 = vshrl.u32 %v1494, 7
        %1497 = vset.pattern.permute.xlu0 %v1495
        %1498 = vperm.xlu0 %1497, %v1493
        %v1499 = vpop.permute.xlu0 %1498
        %v1500 = vlaneseq
        %v1501 = vshrl.u32 %v1500, 7
        %v1502 = vadd.s32 %v1501, 8
        %1503 = vset.pattern.permute.xlu0 %v1502
        %1504 = vperm.xlu0 %1503, %v1493
        %v1505 = vpop.permute.xlu0 %1504
        %v1506 = vperm.slane %v1386, 1
        %v1507 = vlaneseq
        %v1508 = vshrl.u32 %v1507, 7
        %1510 = vset.pattern.permute.xlu0 %v1508
        %1511 = vperm.xlu0 %1510, %v1506
        %v1512 = vpop.permute.xlu0 %1511
        %v1513 = vlaneseq
        %v1514 = vshrl.u32 %v1513, 7
        %v1515 = vadd.s32 %v1514, 8
        %1516 = vset.pattern.permute.xlu0 %v1515
        %1517 = vperm.xlu0 %1516, %v1506
        %v1518 = vpop.permute.xlu0 %1517
        %v1519 = vperm.slane %v1386, 2
        %v1520 = vlaneseq
        %v1521 = vshrl.u32 %v1520, 7
        %1523 = vset.pattern.permute.xlu0 %v1521
        %1524 = vperm.xlu0 %1523, %v1519
        %v1525 = vpop.permute.xlu0 %1524
        %v1526 = vlaneseq
        %v1527 = vshrl.u32 %v1526, 7
        %v1528 = vadd.s32 %v1527, 8
        %1529 = vset.pattern.permute.xlu0 %v1528
        %1530 = vperm.xlu0 %1529, %v1519
        %v1531 = vpop.permute.xlu0 %1530
        %v1532 = vperm.slane %v1386, 3
        %v1533 = vlaneseq
        %v1534 = vshrl.u32 %v1533, 7
        %1536 = vset.pattern.permute.xlu0 %v1534
        %1537 = vperm.xlu0 %1536, %v1532
        %v1538 = vpop.permute.xlu0 %1537
        %v1539 = vlaneseq
        %v1540 = vshrl.u32 %v1539, 7
        %v1541 = vadd.s32 %v1540, 8
        %1542 = vset.pattern.permute.xlu0 %v1541
        %1543 = vperm.xlu0 %1542, %v1532
        %v1544 = vpop.permute.xlu0 %1543
        %v1545 = vperm.slane %v1386, 4
        %v1546 = vlaneseq
        %v1547 = vshrl.u32 %v1546, 7
        %1549 = vset.pattern.permute.xlu0 %v1547
        %1550 = vperm.xlu0 %1549, %v1545
        %v1551 = vpop.permute.xlu0 %1550
        %v1552 = vlaneseq
        %v1553 = vshrl.u32 %v1552, 7
        %v1554 = vadd.s32 %v1553, 8
        %1555 = vset.pattern.permute.xlu0 %v1554
        %1556 = vperm.xlu0 %1555, %v1545
        %v1557 = vpop.permute.xlu0 %1556
        %v1558 = vperm.slane %v1386, 5
        %v1559 = vlaneseq
        %v1560 = vshrl.u32 %v1559, 7
        %1562 = vset.pattern.permute.xlu0 %v1560
        %1563 = vperm.xlu0 %1562, %v1558
        %v1564 = vpop.permute.xlu0 %1563
        %v1565 = vlaneseq
        %v1566 = vshrl.u32 %v1565, 7
        %v1567 = vadd.s32 %v1566, 8
        %1568 = vset.pattern.permute.xlu0 %v1567
        %1569 = vperm.xlu0 %1568, %v1558
        %v1570 = vpop.permute.xlu0 %1569
        %v1571 = vperm.slane %v1386, 6
        %v1572 = vlaneseq
        %v1573 = vshrl.u32 %v1572, 7
        %1575 = vset.pattern.permute.xlu0 %v1573
        %1576 = vperm.xlu0 %1575, %v1571
        %v1577 = vpop.permute.xlu0 %1576
        %v1578 = vlaneseq
        %v1579 = vshrl.u32 %v1578, 7
        %v1580 = vadd.s32 %v1579, 8
        %1581 = vset.pattern.permute.xlu0 %v1580
        %1582 = vperm.xlu0 %1581, %v1571
        %v1583 = vpop.permute.xlu0 %1582
        %v1584 = vperm.slane %v1386, 7
        %v1585 = vlaneseq
        %v1586 = vshrl.u32 %v1585, 7
        %1588 = vset.pattern.permute.xlu0 %v1586
        %1589 = vperm.xlu0 %1588, %v1584
        %v1590 = vpop.permute.xlu0 %1589
        %v1591 = vlaneseq
        %v1592 = vshrl.u32 %v1591, 7
        %v1593 = vadd.s32 %v1592, 8
        %1594 = vset.pattern.permute.xlu0 %v1593
        %1595 = vperm.xlu0 %1594, %v1584
        %v1596 = vpop.permute.xlu0 %1595
        %v1597 = vmul.f32 %v1395, %v801
        %v1598 = vmul.f32 %v1401, %v802
        %v1599 = vmul.f32 %v1408, %v801
        %v1600 = vmul.f32 %v1414, %v802
        %v1601 = vmul.f32 %v1421, %v801
        %v1602 = vmul.f32 %v1427, %v802
        %v1603 = vmul.f32 %v1434, %v801
        %v1604 = vmul.f32 %v1440, %v802
        %v1605 = vmul.f32 %v1447, %v801
        %v1606 = vmul.f32 %v1453, %v802
        %v1607 = vmul.f32 %v1460, %v801
        %v1608 = vmul.f32 %v1466, %v802
        %v1609 = vmul.f32 %v1473, %v801
        %v1610 = vmul.f32 %v1479, %v802
        %v1611 = vmul.f32 %v1486, %v801
        %v1612 = vmul.f32 %v1492, %v802
        %v1613 = vmul.f32 %v1499, %v801
        %v1614 = vmul.f32 %v1505, %v802
        %v1615 = vmul.f32 %v1512, %v801
        %v1616 = vmul.f32 %v1518, %v802
        %v1617 = vmul.f32 %v1525, %v801
        %v1618 = vmul.f32 %v1531, %v802
        %v1619 = vmul.f32 %v1538, %v801
        %v1620 = vmul.f32 %v1544, %v802
        %v1621 = vmul.f32 %v1551, %v801
        %v1622 = vmul.f32 %v1557, %v802
        %v1623 = vmul.f32 %v1564, %v801
        %v1624 = vmul.f32 %v1570, %v802
        %v1625 = vmul.f32 %v1577, %v801
        %v1626 = vmul.f32 %v1583, %v802
        %v1627 = vmul.f32 %v1590, %v801
        %v1628 = vmul.f32 %v1596, %v802
        %v1629 = vperm.slane %v1387, 0
        %v1630 = vlaneseq
        %v1631 = vshrl.u32 %v1630, 7
        %1633 = vset.pattern.permute.xlu0 %v1631
        %1634 = vperm.xlu0 %1633, %v1629
        %v1635 = vpop.permute.xlu0 %1634
        %v1636 = vlaneseq
        %v1637 = vshrl.u32 %v1636, 7
        %v1638 = vadd.s32 %v1637, 8
        %1639 = vset.pattern.permute.xlu0 %v1638
        %1640 = vperm.xlu0 %1639, %v1629
        %v1641 = vpop.permute.xlu0 %1640
        %v1642 = vperm.slane %v1387, 1
        %v1643 = vlaneseq
        %v1644 = vshrl.u32 %v1643, 7
        %1646 = vset.pattern.permute.xlu0 %v1644
        %1647 = vperm.xlu0 %1646, %v1642
        %v1648 = vpop.permute.xlu0 %1647
        %v1649 = vlaneseq
        %v1650 = vshrl.u32 %v1649, 7
        %v1651 = vadd.s32 %v1650, 8
        %1652 = vset.pattern.permute.xlu0 %v1651
        %1653 = vperm.xlu0 %1652, %v1642
        %v1654 = vpop.permute.xlu0 %1653
        %v1655 = vperm.slane %v1387, 2
        %v1656 = vlaneseq
        %v1657 = vshrl.u32 %v1656, 7
        %1659 = vset.pattern.permute.xlu0 %v1657
        %1660 = vperm.xlu0 %1659, %v1655
        %v1661 = vpop.permute.xlu0 %1660
        %v1662 = vlaneseq
        %v1663 = vshrl.u32 %v1662, 7
        %v1664 = vadd.s32 %v1663, 8
        %1665 = vset.pattern.permute.xlu0 %v1664
        %1666 = vperm.xlu0 %1665, %v1655
        %v1667 = vpop.permute.xlu0 %1666
        %v1668 = vperm.slane %v1387, 3
        %v1669 = vlaneseq
        %v1670 = vshrl.u32 %v1669, 7
        %1672 = vset.pattern.permute.xlu0 %v1670
        %1673 = vperm.xlu0 %1672, %v1668
        %v1674 = vpop.permute.xlu0 %1673
        %v1675 = vlaneseq
        %v1676 = vshrl.u32 %v1675, 7
        %v1677 = vadd.s32 %v1676, 8
        %1678 = vset.pattern.permute.xlu0 %v1677
        %1679 = vperm.xlu0 %1678, %v1668
        %v1680 = vpop.permute.xlu0 %1679
        %v1681 = vperm.slane %v1387, 4
        %v1682 = vlaneseq
        %v1683 = vshrl.u32 %v1682, 7
        %1685 = vset.pattern.permute.xlu0 %v1683
        %1686 = vperm.xlu0 %1685, %v1681
        %v1687 = vpop.permute.xlu0 %1686
        %v1688 = vlaneseq
        %v1689 = vshrl.u32 %v1688, 7
        %v1690 = vadd.s32 %v1689, 8
        %1691 = vset.pattern.permute.xlu0 %v1690
        %1692 = vperm.xlu0 %1691, %v1681
        %v1693 = vpop.permute.xlu0 %1692
        %v1694 = vperm.slane %v1387, 5
        %v1695 = vlaneseq
        %v1696 = vshrl.u32 %v1695, 7
        %1698 = vset.pattern.permute.xlu0 %v1696
        %1699 = vperm.xlu0 %1698, %v1694
        %v1700 = vpop.permute.xlu0 %1699
        %v1701 = vlaneseq
        %v1702 = vshrl.u32 %v1701, 7
        %v1703 = vadd.s32 %v1702, 8
        %1704 = vset.pattern.permute.xlu0 %v1703
        %1705 = vperm.xlu0 %1704, %v1694
        %v1706 = vpop.permute.xlu0 %1705
        %v1707 = vperm.slane %v1387, 6
        %v1708 = vlaneseq
        %v1709 = vshrl.u32 %v1708, 7
        %1711 = vset.pattern.permute.xlu0 %v1709
        %1712 = vperm.xlu0 %1711, %v1707
        %v1713 = vpop.permute.xlu0 %1712
        %v1714 = vlaneseq
        %v1715 = vshrl.u32 %v1714, 7
        %v1716 = vadd.s32 %v1715, 8
        %1717 = vset.pattern.permute.xlu0 %v1716
        %1718 = vperm.xlu0 %1717, %v1707
        %v1719 = vpop.permute.xlu0 %1718
        %v1720 = vperm.slane %v1387, 7
        %v1721 = vlaneseq
        %v1722 = vshrl.u32 %v1721, 7
        %1724 = vset.pattern.permute.xlu0 %v1722
        %1725 = vperm.xlu0 %1724, %v1720
        %v1726 = vpop.permute.xlu0 %1725
        %v1727 = vlaneseq
        %v1728 = vshrl.u32 %v1727, 7
        %v1729 = vadd.s32 %v1728, 8
        %1730 = vset.pattern.permute.xlu0 %v1729
        %1731 = vperm.xlu0 %1730, %v1720
        %v1732 = vpop.permute.xlu0 %1731
        %v1733 = vperm.slane %v1388, 0
        %v1734 = vlaneseq
        %v1735 = vshrl.u32 %v1734, 7
        %1737 = vset.pattern.permute.xlu0 %v1735
        %1738 = vperm.xlu0 %1737, %v1733
        %v1739 = vpop.permute.xlu0 %1738
        %v1740 = vlaneseq
        %v1741 = vshrl.u32 %v1740, 7
        %v1742 = vadd.s32 %v1741, 8
        %1743 = vset.pattern.permute.xlu0 %v1742
        %1744 = vperm.xlu0 %1743, %v1733
        %v1745 = vpop.permute.xlu0 %1744
        %v1746 = vperm.slane %v1388, 1
        %v1747 = vlaneseq
        %v1748 = vshrl.u32 %v1747, 7
        %1750 = vset.pattern.permute.xlu0 %v1748
        %1751 = vperm.xlu0 %1750, %v1746
        %v1752 = vpop.permute.xlu0 %1751
        %v1753 = vlaneseq
        %v1754 = vshrl.u32 %v1753, 7
        %v1755 = vadd.s32 %v1754, 8
        %1756 = vset.pattern.permute.xlu0 %v1755
        %1757 = vperm.xlu0 %1756, %v1746
        %v1758 = vpop.permute.xlu0 %1757
        %v1759 = vperm.slane %v1388, 2
        %v1760 = vlaneseq
        %v1761 = vshrl.u32 %v1760, 7
        %1763 = vset.pattern.permute.xlu0 %v1761
        %1764 = vperm.xlu0 %1763, %v1759
        %v1765 = vpop.permute.xlu0 %1764
        %v1766 = vlaneseq
        %v1767 = vshrl.u32 %v1766, 7
        %v1768 = vadd.s32 %v1767, 8
        %1769 = vset.pattern.permute.xlu0 %v1768
        %1770 = vperm.xlu0 %1769, %v1759
        %v1771 = vpop.permute.xlu0 %1770
        %v1772 = vperm.slane %v1388, 3
        %v1773 = vlaneseq
        %v1774 = vshrl.u32 %v1773, 7
        %1776 = vset.pattern.permute.xlu0 %v1774
        %1777 = vperm.xlu0 %1776, %v1772
        %v1778 = vpop.permute.xlu0 %1777
        %v1779 = vlaneseq
        %v1780 = vshrl.u32 %v1779, 7
        %v1781 = vadd.s32 %v1780, 8
        %1782 = vset.pattern.permute.xlu0 %v1781
        %1783 = vperm.xlu0 %1782, %v1772
        %v1784 = vpop.permute.xlu0 %1783
        %v1785 = vperm.slane %v1388, 4
        %v1786 = vlaneseq
        %v1787 = vshrl.u32 %v1786, 7
        %1789 = vset.pattern.permute.xlu0 %v1787
        %1790 = vperm.xlu0 %1789, %v1785
        %v1791 = vpop.permute.xlu0 %1790
        %v1792 = vlaneseq
        %v1793 = vshrl.u32 %v1792, 7
        %v1794 = vadd.s32 %v1793, 8
        %1795 = vset.pattern.permute.xlu0 %v1794
        %1796 = vperm.xlu0 %1795, %v1785
        %v1797 = vpop.permute.xlu0 %1796
        %v1798 = vperm.slane %v1388, 5
        %v1799 = vlaneseq
        %v1800 = vshrl.u32 %v1799, 7
        %1802 = vset.pattern.permute.xlu0 %v1800
        %1803 = vperm.xlu0 %1802, %v1798
        %v1804 = vpop.permute.xlu0 %1803
        %v1805 = vlaneseq
        %v1806 = vshrl.u32 %v1805, 7
        %v1807 = vadd.s32 %v1806, 8
        %1808 = vset.pattern.permute.xlu0 %v1807
        %1809 = vperm.xlu0 %1808, %v1798
        %v1810 = vpop.permute.xlu0 %1809
        %v1811 = vperm.slane %v1388, 6
        %v1812 = vlaneseq
        %v1813 = vshrl.u32 %v1812, 7
        %1815 = vset.pattern.permute.xlu0 %v1813
        %1816 = vperm.xlu0 %1815, %v1811
        %v1817 = vpop.permute.xlu0 %1816
        %v1818 = vlaneseq
        %v1819 = vshrl.u32 %v1818, 7
        %v1820 = vadd.s32 %v1819, 8
        %1821 = vset.pattern.permute.xlu0 %v1820
        %1822 = vperm.xlu0 %1821, %v1811
        %v1823 = vpop.permute.xlu0 %1822
        %v1824 = vperm.slane %v1388, 7
        %v1825 = vlaneseq
        %v1826 = vshrl.u32 %v1825, 7
        %1828 = vset.pattern.permute.xlu0 %v1826
        %1829 = vperm.xlu0 %1828, %v1824
        %v1830 = vpop.permute.xlu0 %1829
        %v1831 = vlaneseq
        %v1832 = vshrl.u32 %v1831, 7
        %v1833 = vadd.s32 %v1832, 8
        %1834 = vset.pattern.permute.xlu0 %v1833
        %1835 = vperm.xlu0 %1834, %v1824
        %v1836 = vpop.permute.xlu0 %1835
        %v1839 = vrot.slane %v799, 1
        %v1840 = vrot.slane %v799, 2
        %v1841 = vrot.slane %v799, 3
        %v1842 = vrot.slane %v799, 4
        %v1843 = vrot.slane %v799, 5
        %v1844 = vrot.slane %v799, 6
        %v1845 = vrot.slane %v799, 7
        %v1846 = vrot.slane %v800, 1
        %v1847 = vrot.slane %v800, 2
        %v1848 = vrot.slane %v800, 3
        %v1849 = vrot.slane %v800, 4
        %v1850 = vrot.slane %v800, 5
        %v1851 = vrot.slane %v800, 6
        %v1852 = vrot.slane %v800, 7
        %v1853 = vperm.slane %v799, 0
        %v1854 = vperm.slane %v1839, 0
        %v1855 = vperm.slane %v1840, 0
        %v1856 = vperm.slane %v1841, 0
        %v1857 = vperm.slane %v1842, 0
        %v1858 = vperm.slane %v1843, 0
        %v1859 = vperm.slane %v1844, 0
        %v1860 = vperm.slane %v1845, 0
        %v1861 = vperm.slane %v800, 0
        %v1862 = vperm.slane %v1846, 0
        %v1863 = vperm.slane %v1847, 0
        %v1864 = vperm.slane %v1848, 0
        %v1865 = vperm.slane %v1849, 0
        %v1866 = vperm.slane %v1850, 0
        %v1867 = vperm.slane %v1851, 0
        %v1868 = vperm.slane %v1852, 0
        %v1885 = vmul.f32 %v1635, %v1853
        %v1886 = vmul.f32 %v1641, %v1853
        %v1887 = vmul.f32 %v1648, %v1854
        %v1888 = vmul.f32 %v1654, %v1854
        %v1889 = vmul.f32 %v1661, %v1855
        %v1890 = vmul.f32 %v1667, %v1855
        %v1891 = vmul.f32 %v1674, %v1856
        %v1892 = vmul.f32 %v1680, %v1856
        %v1893 = vmul.f32 %v1687, %v1857
        %v1894 = vmul.f32 %v1693, %v1857
        %v1895 = vmul.f32 %v1700, %v1858
        %v1896 = vmul.f32 %v1706, %v1858
        %v1897 = vmul.f32 %v1713, %v1859
        %v1898 = vmul.f32 %v1719, %v1859
        %v1899 = vmul.f32 %v1726, %v1860
        %v1900 = vmul.f32 %v1732, %v1860
        %v1901 = vmul.f32 %v1739, %v1861
        %v1902 = vmul.f32 %v1745, %v1861
        %v1903 = vmul.f32 %v1752, %v1862
        %v1904 = vmul.f32 %v1758, %v1862
        %v1905 = vmul.f32 %v1765, %v1863
        %v1906 = vmul.f32 %v1771, %v1863
        %v1907 = vmul.f32 %v1778, %v1864
        %v1908 = vmul.f32 %v1784, %v1864
        %v1909 = vmul.f32 %v1791, %v1865
        %v1910 = vmul.f32 %v1797, %v1865
        %v1911 = vmul.f32 %v1804, %v1866
        %v1912 = vmul.f32 %v1810, %v1866
        %v1913 = vmul.f32 %v1817, %v1867
        %v1914 = vmul.f32 %v1823, %v1867
        %v1915 = vmul.f32 %v1830, %v1868
        %v1916 = vmul.f32 %v1836, %v1868
        %v1917 = vadd.f32 %v1597, %v1885
        %v1918 = vadd.f32 %v1598, %v1886
        %v1919 = vadd.f32 %v1599, %v1887
        %v1920 = vadd.f32 %v1600, %v1888
        %v1921 = vadd.f32 %v1601, %v1889
        %v1922 = vadd.f32 %v1602, %v1890
        %v1923 = vadd.f32 %v1603, %v1891
        %v1924 = vadd.f32 %v1604, %v1892
        %v1925 = vadd.f32 %v1605, %v1893
        %v1926 = vadd.f32 %v1606, %v1894
        %v1927 = vadd.f32 %v1607, %v1895
        %v1928 = vadd.f32 %v1608, %v1896
        %v1929 = vadd.f32 %v1609, %v1897
        %v1930 = vadd.f32 %v1610, %v1898
        %v1931 = vadd.f32 %v1611, %v1899
        %v1932 = vadd.f32 %v1612, %v1900
        %v1933 = vadd.f32 %v1613, %v1901
        %v1934 = vadd.f32 %v1614, %v1902
        %v1935 = vadd.f32 %v1615, %v1903
        %v1936 = vadd.f32 %v1616, %v1904
        %v1937 = vadd.f32 %v1617, %v1905
        %v1938 = vadd.f32 %v1618, %v1906
        %v1939 = vadd.f32 %v1619, %v1907
        %v1940 = vadd.f32 %v1620, %v1908
        %v1941 = vadd.f32 %v1621, %v1909
        %v1942 = vadd.f32 %v1622, %v1910
        %v1943 = vadd.f32 %v1623, %v1911
        %v1944 = vadd.f32 %v1624, %v1912
        %v1945 = vadd.f32 %v1625, %v1913
        %v1946 = vadd.f32 %v1626, %v1914
        %v1947 = vadd.f32 %v1627, %v1915
        %v1948 = vadd.f32 %v1628, %v1916
        %1950 = vset.pattern.permute.xlu0 0
        %1951 = vperm.xlu0 %1950, %v805
        %v1952 = vpop.permute.xlu0 %1951
        %1955 = vset.pattern.permute.xlu0 0
        %1956 = vperm.xlu0 %1955, %v806
        %v1957 = vpop.permute.xlu0 %1956
        %v1959 = vmul.f32 %v1917, %v1952
        %v1960 = vmul.f32 %v1918, %v1957
        %v1961 = vmul.f32 %v1919, %v1952
        %v1962 = vmul.f32 %v1920, %v1957
        %v1963 = vmul.f32 %v1921, %v1952
        %v1964 = vmul.f32 %v1922, %v1957
        %v1965 = vmul.f32 %v1923, %v1952
        %v1966 = vmul.f32 %v1924, %v1957
        %v1967 = vmul.f32 %v1925, %v1952
        %v1968 = vmul.f32 %v1926, %v1957
        %v1969 = vmul.f32 %v1927, %v1952
        %v1970 = vmul.f32 %v1928, %v1957
        %v1971 = vmul.f32 %v1929, %v1952
        %v1972 = vmul.f32 %v1930, %v1957
        %v1973 = vmul.f32 %v1931, %v1952
        %v1974 = vmul.f32 %v1932, %v1957
        %v1975 = vmul.f32 %v1933, %v1952
        %v1976 = vmul.f32 %v1934, %v1957
        %v1977 = vmul.f32 %v1935, %v1952
        %v1978 = vmul.f32 %v1936, %v1957
        %v1979 = vmul.f32 %v1937, %v1952
        %v1980 = vmul.f32 %v1938, %v1957
        %v1981 = vmul.f32 %v1939, %v1952
        %v1982 = vmul.f32 %v1940, %v1957
        %v1983 = vmul.f32 %v1941, %v1952
        %v1984 = vmul.f32 %v1942, %v1957
        %v1985 = vmul.f32 %v1943, %v1952
        %v1986 = vmul.f32 %v1944, %v1957
        %v1987 = vmul.f32 %v1945, %v1952
        %v1988 = vmul.f32 %v1946, %v1957
        %v1989 = vmul.f32 %v1947, %v1952
        %v1990 = vmul.f32 %v1948, %v1957
        %1991 = vst.msk [vmem:[%s565] sm:$0xff] %vm839, %v1959
        %1992 = vst.msk [vmem:[%s565 + $0x8] sm:$0xff] %vm839, %v1960
        %1993 = vst.msk [vmem:[%s565 + $0x10] sm:$0xff] %vm839, %v1961
        %1994 = vst.msk [vmem:[%s565 + $0x18] sm:$0xff] %vm839, %v1962
        %1995 = vst.msk [vmem:[%s565 + $0x20] sm:$0xff] %vm839, %v1963
        %1996 = vst.msk [vmem:[%s565 + $0x28] sm:$0xff] %vm839, %v1964
        %1997 = vst.msk [vmem:[%s565 + $0x30] sm:$0xff] %vm839, %v1965
        %1998 = vst.msk [vmem:[%s565 + $0x38] sm:$0xff] %vm839, %v1966
        %1999 = vst.msk [vmem:[%s565 + $0x40] sm:$0xff] %vm839, %v1967
        %2000 = vst.msk [vmem:[%s565 + $0x48] sm:$0xff] %vm839, %v1968
        %2001 = vst.msk [vmem:[%s565 + $0x50] sm:$0xff] %vm839, %v1969
        %2002 = vst.msk [vmem:[%s565 + $0x58] sm:$0xff] %vm839, %v1970
        %2003 = vst.msk [vmem:[%s565 + $0x60] sm:$0xff] %vm839, %v1971
        %2004 = vst.msk [vmem:[%s565 + $0x68] sm:$0xff] %vm839, %v1972
        %2005 = vst.msk [vmem:[%s565 + $0x70] sm:$0xff] %vm839, %v1973
        %2006 = vst.msk [vmem:[%s565 + $0x78] sm:$0xff] %vm839, %v1974
        %2007 = vst.msk [vmem:[%s565 + $0x80] sm:$0xff] %vm839, %v1975
        %2008 = vst.msk [vmem:[%s565 + $0x88] sm:$0xff] %vm839, %v1976
        %2009 = vst.msk [vmem:[%s565 + $0x90] sm:$0xff] %vm839, %v1977
        %2010 = vst.msk [vmem:[%s565 + $0x98] sm:$0xff] %vm839, %v1978
        %2011 = vst.msk [vmem:[%s565 + $0xa0] sm:$0xff] %vm839, %v1979
        %2012 = vst.msk [vmem:[%s565 + $0xa8] sm:$0xff] %vm839, %v1980
        %2013 = vst.msk [vmem:[%s565 + $0xb0] sm:$0xff] %vm839, %v1981
        %2014 = vst.msk [vmem:[%s565 + $0xb8] sm:$0xff] %vm839, %v1982
        %2015 = vst.msk [vmem:[%s565 + $0xc0] sm:$0xff] %vm839, %v1983
        %2016 = vst.msk [vmem:[%s565 + $0xc8] sm:$0xff] %vm839, %v1984
        %2017 = vst.msk [vmem:[%s565 + $0xd0] sm:$0xff] %vm839, %v1985
        %2018 = vst.msk [vmem:[%s565 + $0xd8] sm:$0xff] %vm839, %v1986
        %2019 = vst.msk [vmem:[%s565 + $0xe0] sm:$0xff] %vm839, %v1987
        %2020 = vst.msk [vmem:[%s565 + $0xe8] sm:$0xff] %vm839, %v1988
        %2021 = vst.msk [vmem:[%s565 + $0xf0] sm:$0xff] %vm839, %v1989
        %2022 = vst.msk [vmem:[%s565 + $0xf8] sm:$0xff] %vm839, %v1990
        %s2023 = sand.u32 %s297, 1
        %s2024 = scalar_lea.sflag [#allocation4], %s2023
        %s2025 = sand.u32 %s297, 1
        %s2026 = smul.addr %s2025, 256
        %s2027 = scalar_lea.vmem [#allocation5], %s2026
        // Predicated region
        $region61: #{tpu_custom_call.1} parent=55 // pred_check
          %p2028 = pneg %p307
        $region62: #{tpu_custom_call.1} parent=55 // pred_check_branch
          %2030 = sbr.rel (%p2028) target = $region64
        $region63: #{tpu_custom_call.1} parent=55 // pred_region
          #allocation9 [shape = 'u32[6]{0}', space=smem, size = 0x18, scoped, tag = 'DMA stride descriptor']
          %s2031 = smul.u32 16, %s32
          %s2032 = smul.u32 2, %s33
          %2034 = vsyncadd %s2024, 0
          %s2035 = smul.addr %s2031, 4
          %s2036 = sadd.s32 %s2032, %s2035
          %s2037 = smul.addr %s31, 128
          %s2038 = sadd.s32 %s2036, %s2037
          %s2039 = smul.addr %s2038, 8
          %s2040 = scalar_lea.hbm %s9, %s2039
          %s2042 = sshll.u32 1, 14
          %s2043 = sxor.u32 4294967295, %s2042
          %s2046 = sshll.u32 7, 18
          %s2047 = sxor.u32 4294967295, %s2046
          %s2048 = sand.u32 0, %s2047
          %s2050 = sor.u32 %s2048, 0
          %s2051 = sshll.u32 %s2027, 4
          %s2052 = int_to_ptr.vmem [resolvable:$true] %s2051
          %s2053 = sshll.u32 %s2040, 4
          %s2054 = int_to_ptr.hbm [resolvable:$true] %s2053
          %2060 = sst [smem:[#allocation9]] 256
          %s2061 = scalar_lea.smem [#allocation9], 1
          %2062 = sst [smem:[%s2061]] 512
          %s2063 = scalar_lea.smem [#allocation9], 2
          %2064 = sst [smem:[%s2063]] 2
          %s2065 = scalar_lea.smem [#allocation9], 3
          %2066 = sst [smem:[%s2065]] 128
          %s2067 = scalar_lea.smem [#allocation9], 4
          %2068 = sst [smem:[%s2067]] 128
          %s2069 = scalar_lea.smem [#allocation9], 5
          %2070 = sst [smem:[%s2069]] 8
          %2072 = dma.general %s2052, 4096, %s2054, %s2024, [#allocation8], [#allocation9], %s2050, 0
        $region64: #{tpu_custom_call.1} parent=55 // pred_fallthru
          _
      $region56: #{tpu_custom_call.1} parent=5 // pred_fallthru
        _
      %p2073 = scmp.le.s32.totalorder 2, %s21
      // Predicated region
      $region65: #{tpu_custom_call.1} parent=5 // pred_check
        %p2074 = pneg %p2073
      $region66: #{tpu_custom_call.1} parent=5 // pred_check_branch
        %2076 = sbr.rel (%p2074) target = $region68
      $region67: #{tpu_custom_call.1} parent=5 // pred_region
        %s2077 = ssub.s32 %s21, 2
        // Predicated region
        $region69: #{tpu_custom_call.1} parent=67 // pred_check
          %p2078 = pneg %p313
        $region70: #{tpu_custom_call.1} parent=67 // pred_check_branch
          %2080 = sbr.rel (%p2078) target = $region72
        $region71: #{tpu_custom_call.1} parent=67 // pred_region
          %s2081 = sand.u32 %s298, 1
          %s2082 = scalar_lea.sflag [#allocation4], %s2081
          %s2083 = sand.u32 %s298, 1
          %s2084 = smul.addr %s2083, 256
          %s2085 = scalar_lea.vmem [#allocation5], %s2084
          %2087 = dma.done %s2082, 4096
        $region72: #{tpu_custom_call.1} parent=67 // pred_fallthru
          _
      $region68: #{tpu_custom_call.1} parent=5 // pred_fallthru
        _
    $region6: #{tpu_custom_call.1} parent=1 // loop_footer
      %s25 = sadd.s32 1, %s21
    $region7: #{tpu_custom_call.1} parent=1 // loop_footer_branch
      %20 = sbr.rel target = $region3
    $region8: #{tpu_custom_call.1} parent=1 // loop_exit
      _
    %2088 = vsyncpa [#allocation3], 1
    %s2089 = scalar_lea.sflag [#allocation3], 1
    %2090 = vsyncpa %s2089, 1
    %2091 = vsyncpa [#allocation4], 1
    %s2092 = scalar_lea.sflag [#allocation4], 1
    %2093 = vsyncpa %s2092, 1

</llo_original>
